<compile_context>
chip_gen: v7x
topology: tpu7x:2x2x1
jax: 0.10.0
libtpu: 0.0.40
codegen_flags: <defaults>
</compile_context>

<pallas_src>
import functools
import math

import jax
import jax.numpy as jnp
import numpy as np
from jax import lax
from jax.experimental import pallas as pl
from jax.experimental.pallas import tpu as pltpu


def _performer_kernel(q_ref, k_ref, v_ref,
                      wqT_ref, bq_ref, wkT_ref, bk_ref, wvT_ref, bv_ref,
                      wf_bd_ref, bf_ref, mask_ref, woT_ref, bo_ref,
                      o_ref, *,
                      num_heads, num_features, seq_len, batches_per_block,
                      compute_dtype):
    f32 = jnp.float32
    cd = compute_dtype
    HF = num_heads * num_features
    E = q_ref.shape[-1]
    rows = batches_per_block * seq_len
    inv_f = 1.0 / num_features          # (1/sqrt(F))^2 folded once into KV

    q = q_ref[...].astype(cd)
    k = k_ref[...].astype(cd)
    v = v_ref[...].astype(cd)

    # ---- token-pointwise phase on the flattened (rows, E) slab -------------
    # (MXU M = rows = batches_per_block * seq_len; weights already transposed)
    Qp = jnp.dot(q, wqT_ref[...].astype(cd), preferred_element_type=f32) + bq_ref[...]
    Kp = jnp.dot(k, wkT_ref[...].astype(cd), preferred_element_type=f32) + bk_ref[...]
    Vp = jnp.dot(v, wvT_ref[...].astype(cd), preferred_element_type=f32) + bv_ref[...]

    # cos feature map for ALL heads in one lane-dense matmul:
    #   (rows, E) @ (E, H*F) with a block-diagonal feature weight.
    wf_bd = wf_bd_ref[...].astype(cd)
    bf = bf_ref[...]                                   # (1, H*F)
    phiQ = jnp.cos(jnp.dot(Qp.astype(cd), wf_bd, preferred_element_type=f32) + bf)
    phiK = jnp.cos(jnp.dot(Kp.astype(cd), wf_bd, preferred_element_type=f32) + bf)

    # ---- per-batch KV reduction (tile-aligned sublane reshape, no slicing) --
    phiQ3 = phiQ.reshape(batches_per_block, seq_len, HF)
    phiK3 = phiK.reshape(batches_per_block, seq_len, HF)
    Vp3 = Vp.reshape(batches_per_block, seq_len, E)

    # Full (H*F, E) outer product per batch; the block-diagonal head mask
    # zeroes cross-head blocks so the following phiQ @ KV matmul is exactly
    # the per-head contraction (zeros contribute exactly 0).
    KV = lax.dot_general(phiK3.astype(cd), Vp3.astype(cd),
                         (((1,), (1,)), ((0,), (0,))),
                         preferred_element_type=f32)            # (bpb, H*F, E)
    KV = KV * (mask_ref[...] * inv_f)                           # fold 1/F once

    O3 = lax.dot_general(phiQ3.astype(cd), KV.astype(cd),
                         (((2,), (1,)), ((0,), (0,))),
                         preferred_element_type=f32)            # (bpb, L, E)
    QKV = O3.reshape(rows, E)

    # ---- fused output projection (token-pointwise, back on the flat slab) --
    out = jnp.dot(QKV.astype(cd), woT_ref[...].astype(cd),
                  preferred_element_type=f32) + bo_ref[...]
    o_ref[...] = out.astype(o_ref.dtype)


def performer_exp_attention(query, key, value, params, *, num_heads,
                            num_features, batches_per_block=None,
                            compute_dtype=jnp.float32):
    B, L, E = query.shape
    H = num_heads
    F = num_features
    d = E // H
    assert d * H == E, "embed_dim must be divisible by num_heads"

    if batches_per_block is None:
        batches_per_block = B                 # toy sizes: one grid step total
    assert B % batches_per_block == 0
    n_blocks = B // batches_per_block
    rows_per_block = batches_per_block * L

    p = params
    # Pre-transpose once in the wrapper (free for the kernel: no XLU work).
    wqT, wkT, wvT, woT = p["wq"].T, p["wk"].T, p["wv"].T, p["wo"].T
    # Block-diagonal feature weight (E, H*F): diagonal blocks are wf.T (d, F).
    wf_bd = jnp.kron(jnp.eye(H, dtype=p["wf"].dtype), p["wf"].T)
    bf_rep = jnp.tile(p["bf"], (H,)).reshape(1, H * F)
    # (H*F, E) block-diagonal 0/1 mask: 1 where feature-head == output-head.
    head_mask = jnp.kron(jnp.eye(H, dtype=jnp.float32),
                         jnp.ones((F, d), jnp.float32))

    # Flatten batch*seq so token-pointwise matmuls get M = B*L MXU rows.
    q2 = query.reshape(B * L, E)
    k2 = key.reshape(B * L, E)
    v2 = value.reshape(B * L, E)

    kernel = functools.partial(
        _performer_kernel,
        num_heads=H, num_features=F, seq_len=L,
        batches_per_block=batches_per_block, compute_dtype=compute_dtype)

    def const2d(shape):
        # Grid-invariant weight/bias: same block every grid step.
        # NOTE(perf): at realistic E, stage these once into VMEM scratch (or
        # single-buffer them) to avoid 2x double-buffered VMEM per weight.
        return pl.BlockSpec(shape, lambda i: (0, 0))

    row_spec = pl.BlockSpec((rows_per_block, E), lambda i: (i, 0))

    in_specs = [
        row_spec, row_spec, row_spec,            # q, k, v (flattened rows)
        const2d((E, E)), const2d((1, E)),        # wqT, bq
        const2d((E, E)), const2d((1, E)),        # wkT, bk
        const2d((E, E)), const2d((1, E)),        # wvT, bv
        const2d((E, H * F)),                     # block-diag feature weight
        const2d((1, H * F)),                     # feature bias (tiled per head)
        const2d((H * F, E)),                     # block-diag head mask
        const2d((E, E)), const2d((1, E)),        # woT, bo
    ]
    out_spec = pl.BlockSpec((rows_per_block, E), lambda i: (i, 0))

    fn = pl.pallas_call(
        kernel,
        out_shape=jax.ShapeDtypeStruct((B * L, E), jnp.float32),
        grid=(n_blocks,),
        in_specs=in_specs,
        out_specs=out_spec,
        compiler_params=pltpu.CompilerParams(
            dimension_semantics=("parallel",),
            vmem_limit_bytes=32 * 1024 * 1024,
        ),
    )

    out = fn(q2, k2, v2,
             wqT, p["bq"].reshape(1, E),
             wkT, p["bk"].reshape(1, E),
             wvT, p["bv"].reshape(1, E),
             wf_bd, bf_rep, head_mask,
             woT, p["bo"].reshape(1, E))
    return out.reshape(B, L, E)


def reference(query, key, value, p, *, num_heads, num_features):
    """Pure-JAX mirror of the PyTorch forward, for correctness checking."""
    B, L, E = query.shape
    d = E // num_heads
    Qp = query @ p["wq"].T + p["bq"]
    Kp = key @ p["wk"].T + p["bk"]
    Vp = value @ p["wv"].T + p["bv"]
    Q = Qp.reshape(B, L, num_heads, d)
    K = Kp.reshape(B, L, num_heads, d)
    V = Vp.reshape(B, L, num_heads, d)
    phiQ = jnp.cos(jnp.einsum("blhd,fd->blhf", Q, p["wf"]) + p["bf"])
    phiK = jnp.cos(jnp.einsum("blhd,fd->blhf", K, p["wf"]) + p["bf"])
    phiQ = phiQ / math.sqrt(num_features)
    phiK = phiK / math.sqrt(num_features)
    KV = jnp.einsum("blhf,blhe->bhfe", phiK, V)
    QKV = jnp.einsum("blhf,bhfe->blhe", phiQ, KV)
    QKV = QKV.reshape(B, L, E)
    return QKV @ p["wo"].T + p["bo"]


if __name__ == "__main__":
    # Small deterministic config: batch=2, seq=8, embed=32, heads=4, features=64
    B, L, E = 2, 8, 32
    num_heads = 4
    head_dim = E // num_heads
    num_features = 64

    root = jax.random.PRNGKey(0)
    keys = jax.random.split(root, 13)

    params = {
        "wq": jax.random.normal(keys[0], (E, E), jnp.float32) * 0.1,
        "bq": jax.random.normal(keys[1], (E,), jnp.float32) * 0.1,
        "wk": jax.random.normal(keys[2], (E, E), jnp.float32) * 0.1,
        "bk": jax.random.normal(keys[3], (E,), jnp.float32) * 0.1,
        "wv": jax.random.normal(keys[4], (E, E), jnp.float32) * 0.1,
        "bv": jax.random.normal(keys[5], (E,), jnp.float32) * 0.1,
        "wo": jax.random.normal(keys[6], (E, E), jnp.float32) * 0.1,
        "bo": jax.random.normal(keys[7], (E,), jnp.float32) * 0.1,
        # ExpKernelFeatureMap params (torch.randn / 2*pi*torch.rand)
        "wf": jax.random.normal(keys[8], (num_features, head_dim), jnp.float32),
        "bf": 2.0 * math.pi * jax.random.uniform(keys[9], (num_features,), jnp.float32),
    }

    query = jax.random.normal(keys[10], (B, L, E), jnp.float32)
    key_ = jax.random.normal(keys[11], (B, L, E), jnp.float32)
    value = jax.random.normal(keys[12], (B, L, E), jnp.float32)

    out = performer_exp_attention(query, key_, value, params,
                                  num_heads=num_heads, num_features=num_features)
    out = jax.block_until_ready(out)

    ref = reference(query, key_, value, params,
                    num_heads=num_heads, num_features=num_features)
    ref = jax.block_until_ready(ref)

    np.testing.assert_allclose(np.asarray(out), np.asarray(ref), rtol=1e-4, atol=1e-4)
    print("KERNEL_OK")
</pallas_src>

<mosaic_0001>
module attributes {stable_mosaic.version = 11 : i64} {
  func.func @_performer_kernel(%arg0: i32, %arg1: memref<16x32xf32, #tpu.memory_space<vmem>>, %arg2: memref<16x32xf32, #tpu.memory_space<vmem>>, %arg3: memref<16x32xf32, #tpu.memory_space<vmem>>, %arg4: memref<32x32xf32, #tpu.memory_space<vmem>>, %arg5: memref<1x32xf32, #tpu.memory_space<vmem>>, %arg6: memref<32x32xf32, #tpu.memory_space<vmem>>, %arg7: memref<1x32xf32, #tpu.memory_space<vmem>>, %arg8: memref<32x32xf32, #tpu.memory_space<vmem>>, %arg9: memref<1x32xf32, #tpu.memory_space<vmem>>, %arg10: memref<32x256xf32, #tpu.memory_space<vmem>>, %arg11: memref<1x256xf32, #tpu.memory_space<vmem>>, %arg12: memref<256x32xf32, #tpu.memory_space<vmem>>, %arg13: memref<32x32xf32, #tpu.memory_space<vmem>>, %arg14: memref<1x32xf32, #tpu.memory_space<vmem>>, %arg15: memref<16x32xf32, #tpu.memory_space<vmem>>) attributes {dimension_semantics = [#tpu.dimension_semantics<parallel>], iteration_bounds = array<i64: 1>, scalar_prefetch = 0 : i64, scratch_operands = 0 : i64, tpu.core_type = #tpu.core_type<tc>, window_params = [{transform_indices = @transform_0, window_bounds = array<i64: 16, 32>}, {transform_indices = @transform_1, window_bounds = array<i64: 16, 32>}, {transform_indices = @transform_2, window_bounds = array<i64: 16, 32>}, {pipeline_mode = #tpu.pipeline_mode<synchronous>, transform_indices = @transform_3, window_bounds = array<i64: 32, 32>}, {pipeline_mode = #tpu.pipeline_mode<synchronous>, transform_indices = @transform_4, window_bounds = array<i64: 1, 32>}, {pipeline_mode = #tpu.pipeline_mode<synchronous>, transform_indices = @transform_5, window_bounds = array<i64: 32, 32>}, {pipeline_mode = #tpu.pipeline_mode<synchronous>, transform_indices = @transform_6, window_bounds = array<i64: 1, 32>}, {pipeline_mode = #tpu.pipeline_mode<synchronous>, transform_indices = @transform_7, window_bounds = array<i64: 32, 32>}, {pipeline_mode = #tpu.pipeline_mode<synchronous>, transform_indices = @transform_8, window_bounds = array<i64: 1, 32>}, {pipeline_mode = #tpu.pipeline_mode<synchronous>, transform_indices = @transform_9, window_bounds = array<i64: 32, 256>}, {pipeline_mode = #tpu.pipeline_mode<synchronous>, transform_indices = @transform_10, window_bounds = array<i64: 1, 256>}, {pipeline_mode = #tpu.pipeline_mode<synchronous>, transform_indices = @transform_11, window_bounds = array<i64: 256, 32>}, {pipeline_mode = #tpu.pipeline_mode<synchronous>, transform_indices = @transform_12, window_bounds = array<i64: 32, 32>}, {pipeline_mode = #tpu.pipeline_mode<synchronous>, transform_indices = @transform_13, window_bounds = array<i64: 1, 32>}, {transform_indices = @transform_14, window_bounds = array<i64: 16, 32>}]} {
    %c0 = arith.constant 0 : index
    %c0_0 = arith.constant 0 : index
    %0 = vector.load %arg1[%c0, %c0_0] : memref<16x32xf32, #tpu.memory_space<vmem>>, vector<16x32xf32>
    %c0_1 = arith.constant 0 : index
    %c0_2 = arith.constant 0 : index
    %1 = vector.load %arg2[%c0_1, %c0_2] : memref<16x32xf32, #tpu.memory_space<vmem>>, vector<16x32xf32>
    %c0_3 = arith.constant 0 : index
    %c0_4 = arith.constant 0 : index
    %2 = vector.load %arg3[%c0_3, %c0_4] : memref<16x32xf32, #tpu.memory_space<vmem>>, vector<16x32xf32>
    %c0_5 = arith.constant 0 : index
    %c0_6 = arith.constant 0 : index
    %3 = vector.load %arg4[%c0_5, %c0_6] : memref<32x32xf32, #tpu.memory_space<vmem>>, vector<32x32xf32>
    %cst = arith.constant dense<0.000000e+00> : vector<16x32xf32>
    %4 = tpu.matmul %0, %3, %cst {dimension_numbers = #tpu.dot_dimension_numbers<[1], [0], [0], [1], [0, 0, 1, 1], [], []>} : vector<16x32xf32>, vector<32x32xf32>, vector<16x32xf32> -> vector<16x32xf32>
    %c0_7 = arith.constant 0 : index
    %c0_8 = arith.constant 0 : index
    %5 = vector.load %arg5[%c0_7, %c0_8] : memref<1x32xf32, #tpu.memory_space<vmem>>, vector<1x32xf32>
    %6 = vector.broadcast %5 : vector<1x32xf32> to vector<16x32xf32>
    %7 = arith.addf %4, %6 : vector<16x32xf32>
    %c0_9 = arith.constant 0 : index
    %c0_10 = arith.constant 0 : index
    %8 = vector.load %arg6[%c0_9, %c0_10] : memref<32x32xf32, #tpu.memory_space<vmem>>, vector<32x32xf32>
    %cst_11 = arith.constant dense<0.000000e+00> : vector<16x32xf32>
    %9 = tpu.matmul %1, %8, %cst_11 {dimension_numbers = #tpu.dot_dimension_numbers<[1], [0], [0], [1], [0, 0, 1, 1], [], []>} : vector<16x32xf32>, vector<32x32xf32>, vector<16x32xf32> -> vector<16x32xf32>
    %c0_12 = arith.constant 0 : index
    %c0_13 = arith.constant 0 : index
    %10 = vector.load %arg7[%c0_12, %c0_13] : memref<1x32xf32, #tpu.memory_space<vmem>>, vector<1x32xf32>
    %11 = vector.broadcast %10 : vector<1x32xf32> to vector<16x32xf32>
    %12 = arith.addf %9, %11 : vector<16x32xf32>
    %c0_14 = arith.constant 0 : index
    %c0_15 = arith.constant 0 : index
    %13 = vector.load %arg8[%c0_14, %c0_15] : memref<32x32xf32, #tpu.memory_space<vmem>>, vector<32x32xf32>
    %cst_16 = arith.constant dense<0.000000e+00> : vector<16x32xf32>
    %14 = tpu.matmul %2, %13, %cst_16 {dimension_numbers = #tpu.dot_dimension_numbers<[1], [0], [0], [1], [0, 0, 1, 1], [], []>} : vector<16x32xf32>, vector<32x32xf32>, vector<16x32xf32> -> vector<16x32xf32>
    %c0_17 = arith.constant 0 : index
    %c0_18 = arith.constant 0 : index
    %15 = vector.load %arg9[%c0_17, %c0_18] : memref<1x32xf32, #tpu.memory_space<vmem>>, vector<1x32xf32>
    %16 = vector.broadcast %15 : vector<1x32xf32> to vector<16x32xf32>
    %17 = arith.addf %14, %16 : vector<16x32xf32>
    %c0_19 = arith.constant 0 : index
    %c0_20 = arith.constant 0 : index
    %18 = vector.load %arg10[%c0_19, %c0_20] : memref<32x256xf32, #tpu.memory_space<vmem>>, vector<32x256xf32>
    %c0_21 = arith.constant 0 : index
    %c0_22 = arith.constant 0 : index
    %19 = vector.load %arg11[%c0_21, %c0_22] : memref<1x256xf32, #tpu.memory_space<vmem>>, vector<1x256xf32>
    %cst_23 = arith.constant dense<0.000000e+00> : vector<16x256xf32>
    %20 = tpu.matmul %7, %18, %cst_23 {dimension_numbers = #tpu.dot_dimension_numbers<[1], [0], [0], [1], [0, 0, 1, 1], [], []>} : vector<16x32xf32>, vector<32x256xf32>, vector<16x256xf32> -> vector<16x256xf32>
    %21 = vector.broadcast %19 : vector<1x256xf32> to vector<16x256xf32>
    %22 = arith.addf %20, %21 : vector<16x256xf32>
    %23 = math.cos %22 : vector<16x256xf32>
    %cst_24 = arith.constant dense<0.000000e+00> : vector<16x256xf32>
    %24 = tpu.matmul %12, %18, %cst_24 {dimension_numbers = #tpu.dot_dimension_numbers<[1], [0], [0], [1], [0, 0, 1, 1], [], []>} : vector<16x32xf32>, vector<32x256xf32>, vector<16x256xf32> -> vector<16x256xf32>
    %25 = vector.broadcast %19 : vector<1x256xf32> to vector<16x256xf32>
    %26 = arith.addf %24, %25 : vector<16x256xf32>
    %27 = math.cos %26 : vector<16x256xf32>
    %28 = vector.shape_cast %23 : vector<16x256xf32> to vector<2x8x256xf32>
    %29 = vector.shape_cast %27 : vector<16x256xf32> to vector<2x8x256xf32>
    %30 = vector.shape_cast %17 : vector<16x32xf32> to vector<2x8x32xf32>
    %cst_25 = arith.constant dense<0.000000e+00> : vector<2x256x32xf32>
    %31 = tpu.matmul %29, %30, %cst_25 {dimension_numbers = #tpu.dot_dimension_numbers<[1], [1], [2], [2], [0, 0, 0, 2, 1, 2], [0], [0]>} : vector<2x8x256xf32>, vector<2x8x32xf32>, vector<2x256x32xf32> -> vector<2x256x32xf32>
    %c0_26 = arith.constant 0 : index
    %c0_27 = arith.constant 0 : index
    %32 = vector.load %arg12[%c0_26, %c0_27] : memref<256x32xf32, #tpu.memory_space<vmem>>, vector<256x32xf32>
    %cst_28 = arith.constant 1.562500e-02 : f32
    %33 = vector.broadcast %cst_28 : f32 to vector<256x32xf32>
    %34 = arith.mulf %32, %33 : vector<256x32xf32>
    %35 = vector.shape_cast %34 : vector<256x32xf32> to vector<1x256x32xf32>
    %36 = vector.broadcast %35 : vector<1x256x32xf32> to vector<2x256x32xf32>
    %37 = arith.mulf %31, %36 : vector<2x256x32xf32>
    %cst_29 = arith.constant dense<0.000000e+00> : vector<2x8x32xf32>
    %38 = tpu.matmul %28, %37, %cst_29 {dimension_numbers = #tpu.dot_dimension_numbers<[2], [1], [1], [2], [0, 0, 0, 1, 1, 2], [0], [0]>} : vector<2x8x256xf32>, vector<2x256x32xf32>, vector<2x8x32xf32> -> vector<2x8x32xf32>
    %39 = vector.shape_cast %38 : vector<2x8x32xf32> to vector<16x32xf32>
    %c0_30 = arith.constant 0 : index
    %c0_31 = arith.constant 0 : index
    %40 = vector.load %arg13[%c0_30, %c0_31] : memref<32x32xf32, #tpu.memory_space<vmem>>, vector<32x32xf32>
    %cst_32 = arith.constant dense<0.000000e+00> : vector<16x32xf32>
    %41 = tpu.matmul %39, %40, %cst_32 {dimension_numbers = #tpu.dot_dimension_numbers<[1], [0], [0], [1], [0, 0, 1, 1], [], []>} : vector<16x32xf32>, vector<32x32xf32>, vector<16x32xf32> -> vector<16x32xf32>
    %c0_33 = arith.constant 0 : index
    %c0_34 = arith.constant 0 : index
    %42 = vector.load %arg14[%c0_33, %c0_34] : memref<1x32xf32, #tpu.memory_space<vmem>>, vector<1x32xf32>
    %43 = vector.broadcast %42 : vector<1x32xf32> to vector<16x32xf32>
    %44 = arith.addf %41, %43 : vector<16x32xf32>
    %c0_35 = arith.constant 0 : index
    %c0_36 = arith.constant 0 : index
    %45 = vector.load %arg15[%c0_35, %c0_36] : memref<16x32xf32, #tpu.memory_space<vmem>>, vector<16x32xf32>
    tpu.vector_store %arg15[%c0_35, %c0_36], %44 {strides = array<i32>} : memref<16x32xf32, #tpu.memory_space<vmem>>, vector<16x32xf32>,
    return
  }
  func.func @transform_0(%arg0: i32) -> (i32, i32) {
    %c0_i32 = arith.constant 0 : i32
    %c0_i32_0 = arith.constant 0 : i32
    return %arg0, %c0_i32 : i32, i32
  }
  func.func @transform_1(%arg0: i32) -> (i32, i32) {
    %c0_i32 = arith.constant 0 : i32
    %c0_i32_0 = arith.constant 0 : i32
    return %arg0, %c0_i32 : i32, i32
  }
  func.func @transform_2(%arg0: i32) -> (i32, i32) {
    %c0_i32 = arith.constant 0 : i32
    %c0_i32_0 = arith.constant 0 : i32
    return %arg0, %c0_i32 : i32, i32
  }
  func.func @transform_3(%arg0: i32) -> (i32, i32) {
    %c0_i32 = arith.constant 0 : i32
    %c0_i32_0 = arith.constant 0 : i32
    %c0_i32_1 = arith.constant 0 : i32
    return %c0_i32, %c0_i32_0 : i32, i32
  }
  func.func @transform_4(%arg0: i32) -> (i32, i32) {
    %c0_i32 = arith.constant 0 : i32
    %c0_i32_0 = arith.constant 0 : i32
    %c0_i32_1 = arith.constant 0 : i32
    return %c0_i32, %c0_i32_0 : i32, i32
  }
  func.func @transform_5(%arg0: i32) -> (i32, i32) {
    %c0_i32 = arith.constant 0 : i32
    %c0_i32_0 = arith.constant 0 : i32
    %c0_i32_1 = arith.constant 0 : i32
    return %c0_i32, %c0_i32_0 : i32, i32
  }
  func.func @transform_6(%arg0: i32) -> (i32, i32) {
    %c0_i32 = arith.constant 0 : i32
    %c0_i32_0 = arith.constant 0 : i32
    %c0_i32_1 = arith.constant 0 : i32
    return %c0_i32, %c0_i32_0 : i32, i32
  }
  func.func @transform_7(%arg0: i32) -> (i32, i32) {
    %c0_i32 = arith.constant 0 : i32
    %c0_i32_0 = arith.constant 0 : i32
    %c0_i32_1 = arith.constant 0 : i32
    return %c0_i32, %c0_i32_0 : i32, i32
  }
  func.func @transform_8(%arg0: i32) -> (i32, i32) {
    %c0_i32 = arith.constant 0 : i32
    %c0_i32_0 = arith.constant 0 : i32
    %c0_i32_1 = arith.constant 0 : i32
    return %c0_i32, %c0_i32_0 : i32, i32
  }
  func.func @transform_9(%arg0: i32) -> (i32, i32) {
    %c0_i32 = arith.constant 0 : i32
    %c0_i32_0 = arith.constant 0 : i32
    %c0_i32_1 = arith.constant 0 : i32
    return %c0_i32, %c0_i32_0 : i32, i32
  }
  func.func @transform_10(%arg0: i32) -> (i32, i32) {
    %c0_i32 = arith.constant 0 : i32
    %c0_i32_0 = arith.constant 0 : i32
    %c0_i32_1 = arith.constant 0 : i32
    return %c0_i32, %c0_i32_0 : i32, i32
  }
  func.func @transform_11(%arg0: i32) -> (i32, i32) {
    %c0_i32 = arith.constant 0 : i32
    %c0_i32_0 = arith.constant 0 : i32
    %c0_i32_1 = arith.constant 0 : i32
    return %c0_i32, %c0_i32_0 : i32, i32
  }
  func.func @transform_12(%arg0: i32) -> (i32, i32) {
    %c0_i32 = arith.constant 0 : i32
    %c0_i32_0 = arith.constant 0 : i32
    %c0_i32_1 = arith.constant 0 : i32
    return %c0_i32, %c0_i32_0 : i32, i32
  }
  func.func @transform_13(%arg0: i32) -> (i32, i32) {
    %c0_i32 = arith.constant 0 : i32
    %c0_i32_0 = arith.constant 0 : i32
    %c0_i32_1 = arith.constant 0 : i32
    return %c0_i32, %c0_i32_0 : i32, i32
  }
  func.func @transform_14(%arg0: i32) -> (i32, i32) {
    %c0_i32 = arith.constant 0 : i32
    %c0_i32_0 = arith.constant 0 : i32
    return %arg0, %c0_i32 : i32, i32
  }
}

</mosaic_0001>

<llo_original>
// kernel: tpu_custom_call.1
$region0: #{tpu_custom_call.1}
  #allocation0 [shape = 'u32[]', space=smem, size = 0x4, offset = 0x4, fixed_abs, tag = 'smem constant byte address 0x4 - core index']
  #allocation1 [shape = 'u32[144,128]{1,0:T(1,128)}', space=vmem, size = 0x12000, scoped, tag = 'internal scratch']
  %s0 = inlined_call_operand.vmem [shape: f32[16,32], index: 0, kind: input, shape index: {}]
  %s1 = inlined_call_operand.vmem [shape: f32[16,32], index: 1, kind: input, shape index: {}]
  %s2 = inlined_call_operand.vmem [shape: f32[16,32], index: 2, kind: input, shape index: {}]
  %s3 = inlined_call_operand.vmem [shape: f32[32,32], index: 3, kind: input, shape index: {}]
  %s4 = inlined_call_operand.vmem [shape: f32[1,32], index: 4, kind: input, shape index: {}]
  %s5 = inlined_call_operand.vmem [shape: f32[32,32], index: 5, kind: input, shape index: {}]
  %s6 = inlined_call_operand.vmem [shape: f32[1,32], index: 6, kind: input, shape index: {}]
  %s7 = inlined_call_operand.vmem [shape: f32[32,32], index: 7, kind: input, shape index: {}]
  %s8 = inlined_call_operand.vmem [shape: f32[1,32], index: 8, kind: input, shape index: {}]
  %s9 = inlined_call_operand.vmem [shape: f32[32,256], index: 9, kind: input, shape index: {}]
  %s10 = inlined_call_operand.vmem [shape: f32[1,256], index: 10, kind: input, shape index: {}]
  %s11 = inlined_call_operand.vmem [shape: f32[256,32], index: 11, kind: input, shape index: {}]
  %s12 = inlined_call_operand.vmem [shape: f32[32,32], index: 12, kind: input, shape index: {}]
  %s13 = inlined_call_operand.vmem [shape: f32[1,32], index: 13, kind: input, shape index: {}]
  %s14 = inlined_call_operand.hbm [shape: f32[16,32], index: 14, kind: output, shape index: {}]
  %s15 = sld [smem:[#allocation0]]
  $region66: #{tpu_custom_call.1} parent=0
    _
  %s17 = ssub.s32 1, %s15
  %s18 = scalar_select 0, %s17, %s15
  $region1: #{tpu_custom_call.1} parent=0
    #allocation2 [shape = 'u8[8192]{0}', space=vmem, size = 0x2000, scoped, tag = 'output window, operand 0, single buffered']
    #allocation3 [shape = 's32[1]{0}', space=sflag, size = 0x4, scoped, tag = 'scoped memory for tpu_custom_call.1']
    %19 = vsyncpa [#allocation3], 0
    // Predicated region
    $region2: #{tpu_custom_call.1} parent=1 // pred_check
      _
    $region3: #{tpu_custom_call.1} parent=1 // pred_check_branch
      %21 = sbr.rel (0) target = $region5
    $region4: #{tpu_custom_call.1} parent=1 // pred_region
      _
    $region5: #{tpu_custom_call.1} parent=1 // pred_fallthru
      _
    // Predicated region
    $region6: #{tpu_custom_call.1} parent=1 // pred_check
      _
    $region7: #{tpu_custom_call.1} parent=1 // pred_check_branch
      %23 = sbr.rel (0) target = $region9
    $region8: #{tpu_custom_call.1} parent=1 // pred_region
      _
    $region9: #{tpu_custom_call.1} parent=1 // pred_fallthru
      _
    // Predicated region
    $region10: #{tpu_custom_call.1} parent=1 // pred_check
      _
    $region11: #{tpu_custom_call.1} parent=1 // pred_check_branch
      %25 = sbr.rel (0) target = $region13
    $region12: #{tpu_custom_call.1} parent=1 // pred_region
      _
    $region13: #{tpu_custom_call.1} parent=1 // pred_fallthru
      _
    // Predicated region
    $region14: #{tpu_custom_call.1} parent=1 // pred_check
      _
    $region15: #{tpu_custom_call.1} parent=1 // pred_check_branch
      %27 = sbr.rel (0) target = $region17
    $region16: #{tpu_custom_call.1} parent=1 // pred_region
      _
    $region17: #{tpu_custom_call.1} parent=1 // pred_fallthru
      _
    // Predicated region
    $region18: #{tpu_custom_call.1} parent=1 // pred_check
      _
    $region19: #{tpu_custom_call.1} parent=1 // pred_check_branch
      %29 = sbr.rel (0) target = $region21
    $region20: #{tpu_custom_call.1} parent=1 // pred_region
      _
    $region21: #{tpu_custom_call.1} parent=1 // pred_fallthru
      _
    // Predicated region
    $region22: #{tpu_custom_call.1} parent=1 // pred_check
      _
    $region23: #{tpu_custom_call.1} parent=1 // pred_check_branch
      %31 = sbr.rel (0) target = $region25
    $region24: #{tpu_custom_call.1} parent=1 // pred_region
      _
    $region25: #{tpu_custom_call.1} parent=1 // pred_fallthru
      _
    // Predicated region
    $region26: #{tpu_custom_call.1} parent=1 // pred_check
      _
    $region27: #{tpu_custom_call.1} parent=1 // pred_check_branch
      %33 = sbr.rel (0) target = $region29
    $region28: #{tpu_custom_call.1} parent=1 // pred_region
      _
    $region29: #{tpu_custom_call.1} parent=1 // pred_fallthru
      _
    // Predicated region
    $region30: #{tpu_custom_call.1} parent=1 // pred_check
      _
    $region31: #{tpu_custom_call.1} parent=1 // pred_check_branch
      %35 = sbr.rel (0) target = $region33
    $region32: #{tpu_custom_call.1} parent=1 // pred_region
      _
    $region33: #{tpu_custom_call.1} parent=1 // pred_fallthru
      _
    // Predicated region
    $region34: #{tpu_custom_call.1} parent=1 // pred_check
      _
    $region35: #{tpu_custom_call.1} parent=1 // pred_check_branch
      %37 = sbr.rel (0) target = $region37
    $region36: #{tpu_custom_call.1} parent=1 // pred_region
      _
    $region37: #{tpu_custom_call.1} parent=1 // pred_fallthru
      _
    // Predicated region
    $region38: #{tpu_custom_call.1} parent=1 // pred_check
      _
    $region39: #{tpu_custom_call.1} parent=1 // pred_check_branch
      %39 = sbr.rel (0) target = $region41
    $region40: #{tpu_custom_call.1} parent=1 // pred_region
      _
    $region41: #{tpu_custom_call.1} parent=1 // pred_fallthru
      _
    // Predicated region
    $region42: #{tpu_custom_call.1} parent=1 // pred_check
      _
    $region43: #{tpu_custom_call.1} parent=1 // pred_check_branch
      %41 = sbr.rel (0) target = $region45
    $region44: #{tpu_custom_call.1} parent=1 // pred_region
      _
    $region45: #{tpu_custom_call.1} parent=1 // pred_fallthru
      _
    // Predicated region
    $region46: #{tpu_custom_call.1} parent=1 // pred_check
      _
    $region47: #{tpu_custom_call.1} parent=1 // pred_check_branch
      %43 = sbr.rel (0) target = $region49
    $region48: #{tpu_custom_call.1} parent=1 // pred_region
      _
    $region49: #{tpu_custom_call.1} parent=1 // pred_fallthru
      _
    // Predicated region
    $region50: #{tpu_custom_call.1} parent=1 // pred_check
      _
    $region51: #{tpu_custom_call.1} parent=1 // pred_check_branch
      %45 = sbr.rel (0) target = $region53
    $region52: #{tpu_custom_call.1} parent=1 // pred_region
      _
    $region53: #{tpu_custom_call.1} parent=1 // pred_fallthru
      _
    // Predicated region
    $region54: #{tpu_custom_call.1} parent=1 // pred_check
      _
    $region55: #{tpu_custom_call.1} parent=1 // pred_check_branch
      %47 = sbr.rel (0) target = $region57
    $region56: #{tpu_custom_call.1} parent=1 // pred_region
      _
    $region57: #{tpu_custom_call.1} parent=1 // pred_fallthru
      _
    %v48 = vld [vmem:[%s0] sm:$0xff]
    %v49 = vld [vmem:[%s0 + $0x8] sm:$0xff]
    %v50 = vld [vmem:[%s1] sm:$0xff]
    %v51 = vld [vmem:[%s1 + $0x8] sm:$0xff]
    %v52 = vld [vmem:[%s2] sm:$0xff]
    %v53 = vld [vmem:[%s2 + $0x8] sm:$0xff]
    %v54 = vld [vmem:[%s3] sm:$0xff]
    %v55 = vld [vmem:[%s3 + $0x8] sm:$0xff]
    %v56 = vld [vmem:[%s3 + $0x10] sm:$0xff]
    %v57 = vld [vmem:[%s3 + $0x18] sm:$0xff]
    %v58 = vld [vmem:[%s4] sm:$0x1]
    %v60 = vlaneseq
    %v61 = vshrl.u32 %v60, 7
    %v62 = vsub.s32 0, %v61
    %v63 = vrot.slane %v58, %v62
    %vm65 = vcmask 261120
    %v67 = vsel %vm65, %v48, 0
    %v70 = vsel %vm65, %v49, 0
    %72 = vmatprep.subr.mxu0 0.0
    %73 = vmatpush1.msra.mxu0 %v54
    %74 = vmatprep.subr.mxu0 0.0
    %75 = vmatpush1.msra.mxu0 %v55
    %76 = vmatprep.subr.mxu0 0.0
    %77 = vmatpush1.msra.mxu0 %v56
    %78 = vmatprep.subr.mxu0 0.0
    %79 = vmatpush1.msra.mxu0 %v57
    %80 = vmatprep.subr.mxu0 0.0
    %81 = vmatpush1.msra.mxu0 0.0
    %82 = vmatprep.subr.mxu0 0.0
    %83 = vmatpush1.msra.mxu0 0.0
    %84 = vmatprep.subr.mxu0 0.0
    %85 = vmatpush1.msra.mxu0 0.0
    %86 = vmatprep.subr.mxu0 0.0
    %87 = vmatpush1.msra.mxu0 0.0
    %88 = vmatprep.subr.mxu0 0.0
    %89 = vmatpush1.msra.mxu0 0.0
    %90 = vmatprep.subr.mxu0 0.0
    %91 = vmatpush1.msra.mxu0 0.0
    %92 = vmatprep.subr.mxu0 0.0
    %93 = vmatpush1.msra.mxu0 0.0
    %94 = vmatprep.subr.mxu0 0.0
    %95 = vmatpush1.msra.mxu0 0.0
    %96 = vmatprep.subr.mxu0 0.0
    %97 = vmatpush1.msra.mxu0 0.0
    %98 = vmatprep.subr.mxu0 0.0
    %99 = vmatpush1.msra.mxu0 0.0
    %100 = vmatprep.subr.mxu0 0.0
    %101 = vmatpush1.msra.mxu0 0.0
    %102 = vmatprep.subr.mxu0 0.0
    %103 = vmatpush1.msra.mxu0 0.0
    %104 = vmatprep.subr.mxu0 0.0
    %105 = vmatpush1.msra.mxu0 0.0
    %106 = vmatprep.subr.mxu0 0.0
    %107 = vmatpush1.msra.mxu0 0.0
    %108 = vmatprep.subr.mxu0 0.0
    %109 = vmatpush1.msra.mxu0 0.0
    %110 = vmatprep.subr.mxu0 0.0
    %111 = vmatpush1.msra.mxu0 0.0
    %112 = vmatprep.subr.mxu0 0.0
    %113 = vmatpush1.msra.mxu0 0.0
    %114 = vmatprep.subr.mxu0 0.0
    %115 = vmatpush1.msra.mxu0 0.0
    %116 = vmatprep.subr.mxu0 0.0
    %117 = vmatpush1.msra.mxu0 0.0
    %118 = vmatprep.subr.mxu0 0.0
    %119 = vmatpush1.msra.mxu0 0.0
    %120 = vmatprep.subr.mxu0 0.0
    %121 = vmatpush1.msra.mxu0 0.0
    %122 = vmatprep.subr.mxu0 0.0
    %123 = vmatpush1.msra.mxu0 0.0
    %124 = vmatprep.subr.mxu0 0.0
    %125 = vmatpush1.msra.mxu0 0.0
    %126 = vmatprep.subr.mxu0 0.0
    %127 = vmatpush1.msra.mxu0 0.0
    %128 = vmatprep.subr.mxu0 0.0
    %129 = vmatpush1.msra.mxu0 0.0
    %130 = vmatprep.subr.mxu0 0.0
    %131 = vmatpush1.msra.mxu0 0.0
    %132 = vmatprep.subr.mxu0 0.0
    %133 = vmatpush1.msra.mxu0 0.0
    %134 = vmatprep.subr.mxu0 0.0
    %135 = vmatpush1.msra.mxu0 0.0
    %136 = vmatprep.mubr.f32.mxu0 0.0
    %137 = vmatmul.mubr.f32.gmra.mrb[0].mxu0 %v67
    %v138 = vpop.f32.mrb[0].mxu0
    %v139 = vadd.f32 %v63, %v138
    %v140 = vpop.f32.mrb[0].mxu0
    %141 = vmatprep.mubr.f32.mxu0 0.0
    %142 = vmatmul.mubr.f32.gmra.mrb[0].mxu0 %v70
    %v143 = vpop.f32.mrb[0].mxu0
    %v144 = vadd.f32 %v63, %v143
    %v145 = vpop.f32.mrb[0].mxu0
    %146 = vdwg.mxu0
    %v147 = vld [vmem:[%s5] sm:$0xff]
    %v148 = vld [vmem:[%s5 + $0x8] sm:$0xff]
    %v149 = vld [vmem:[%s5 + $0x10] sm:$0xff]
    %v150 = vld [vmem:[%s5 + $0x18] sm:$0xff]
    %v151 = vld [vmem:[%s6] sm:$0x1]
    %v153 = vlaneseq
    %v154 = vshrl.u32 %v153, 7
    %v155 = vsub.s32 0, %v154
    %v156 = vrot.slane %v151, %v155
    %v159 = vsel %vm65, %v50, 0
    %v162 = vsel %vm65, %v51, 0
    %164 = vmatprep.subr.mxu0 0.0
    %165 = vmatpush1.msra.mxu0 %v147
    %166 = vmatprep.subr.mxu0 0.0
    %167 = vmatpush1.msra.mxu0 %v148
    %168 = vmatprep.subr.mxu0 0.0
    %169 = vmatpush1.msra.mxu0 %v149
    %170 = vmatprep.subr.mxu0 0.0
    %171 = vmatpush1.msra.mxu0 %v150
    %172 = vmatprep.subr.mxu0 0.0
    %173 = vmatpush1.msra.mxu0 0.0
    %174 = vmatprep.subr.mxu0 0.0
    %175 = vmatpush1.msra.mxu0 0.0
    %176 = vmatprep.subr.mxu0 0.0
    %177 = vmatpush1.msra.mxu0 0.0
    %178 = vmatprep.subr.mxu0 0.0
    %179 = vmatpush1.msra.mxu0 0.0
    %180 = vmatprep.subr.mxu0 0.0
    %181 = vmatpush1.msra.mxu0 0.0
    %182 = vmatprep.subr.mxu0 0.0
    %183 = vmatpush1.msra.mxu0 0.0
    %184 = vmatprep.subr.mxu0 0.0
    %185 = vmatpush1.msra.mxu0 0.0
    %186 = vmatprep.subr.mxu0 0.0
    %187 = vmatpush1.msra.mxu0 0.0
    %188 = vmatprep.subr.mxu0 0.0
    %189 = vmatpush1.msra.mxu0 0.0
    %190 = vmatprep.subr.mxu0 0.0
    %191 = vmatpush1.msra.mxu0 0.0
    %192 = vmatprep.subr.mxu0 0.0
    %193 = vmatpush1.msra.mxu0 0.0
    %194 = vmatprep.subr.mxu0 0.0
    %195 = vmatpush1.msra.mxu0 0.0
    %196 = vmatprep.subr.mxu0 0.0
    %197 = vmatpush1.msra.mxu0 0.0
    %198 = vmatprep.subr.mxu0 0.0
    %199 = vmatpush1.msra.mxu0 0.0
    %200 = vmatprep.subr.mxu0 0.0
    %201 = vmatpush1.msra.mxu0 0.0
    %202 = vmatprep.subr.mxu0 0.0
    %203 = vmatpush1.msra.mxu0 0.0
    %204 = vmatprep.subr.mxu0 0.0
    %205 = vmatpush1.msra.mxu0 0.0
    %206 = vmatprep.subr.mxu0 0.0
    %207 = vmatpush1.msra.mxu0 0.0
    %208 = vmatprep.subr.mxu0 0.0
    %209 = vmatpush1.msra.mxu0 0.0
    %210 = vmatprep.subr.mxu0 0.0
    %211 = vmatpush1.msra.mxu0 0.0
    %212 = vmatprep.subr.mxu0 0.0
    %213 = vmatpush1.msra.mxu0 0.0
    %214 = vmatprep.subr.mxu0 0.0
    %215 = vmatpush1.msra.mxu0 0.0
    %216 = vmatprep.subr.mxu0 0.0
    %217 = vmatpush1.msra.mxu0 0.0
    %218 = vmatprep.subr.mxu0 0.0
    %219 = vmatpush1.msra.mxu0 0.0
    %220 = vmatprep.subr.mxu0 0.0
    %221 = vmatpush1.msra.mxu0 0.0
    %222 = vmatprep.subr.mxu0 0.0
    %223 = vmatpush1.msra.mxu0 0.0
    %224 = vmatprep.subr.mxu0 0.0
    %225 = vmatpush1.msra.mxu0 0.0
    %226 = vmatprep.subr.mxu0 0.0
    %227 = vmatpush1.msra.mxu0 0.0
    %228 = vmatprep.mubr.f32.mxu0 0.0
    %229 = vmatmul.mubr.f32.gmra.mrb[0].mxu0 %v159
    %v230 = vpop.f32.mrb[0].mxu0
    %v231 = vadd.f32 %v156, %v230
    %v232 = vpop.f32.mrb[0].mxu0
    %233 = vmatprep.mubr.f32.mxu0 0.0
    %234 = vmatmul.mubr.f32.gmra.mrb[0].mxu0 %v162
    %v235 = vpop.f32.mrb[0].mxu0
    %v236 = vadd.f32 %v156, %v235
    %v237 = vpop.f32.mrb[0].mxu0
    %238 = vdwg.mxu0
    %v239 = vld [vmem:[%s7] sm:$0xff]
    %v240 = vld [vmem:[%s7 + $0x8] sm:$0xff]
    %v241 = vld [vmem:[%s7 + $0x10] sm:$0xff]
    %v242 = vld [vmem:[%s7 + $0x18] sm:$0xff]
    %v243 = vld [vmem:[%s8] sm:$0x1]
    %v245 = vlaneseq
    %v246 = vshrl.u32 %v245, 7
    %v247 = vsub.s32 0, %v246
    %v248 = vrot.slane %v243, %v247
    %v251 = vsel %vm65, %v52, 0
    %v254 = vsel %vm65, %v53, 0
    %256 = vmatprep.subr.mxu0 0.0
    %257 = vmatpush1.msra.mxu0 %v239
    %258 = vmatprep.subr.mxu0 0.0
    %259 = vmatpush1.msra.mxu0 %v240
    %260 = vmatprep.subr.mxu0 0.0
    %261 = vmatpush1.msra.mxu0 %v241
    %262 = vmatprep.subr.mxu0 0.0
    %263 = vmatpush1.msra.mxu0 %v242
    %264 = vmatprep.subr.mxu0 0.0
    %265 = vmatpush1.msra.mxu0 0.0
    %266 = vmatprep.subr.mxu0 0.0
    %267 = vmatpush1.msra.mxu0 0.0
    %268 = vmatprep.subr.mxu0 0.0
    %269 = vmatpush1.msra.mxu0 0.0
    %270 = vmatprep.subr.mxu0 0.0
    %271 = vmatpush1.msra.mxu0 0.0
    %272 = vmatprep.subr.mxu0 0.0
    %273 = vmatpush1.msra.mxu0 0.0
    %274 = vmatprep.subr.mxu0 0.0
    %275 = vmatpush1.msra.mxu0 0.0
    %276 = vmatprep.subr.mxu0 0.0
    %277 = vmatpush1.msra.mxu0 0.0
    %278 = vmatprep.subr.mxu0 0.0
    %279 = vmatpush1.msra.mxu0 0.0
    %280 = vmatprep.subr.mxu0 0.0
    %281 = vmatpush1.msra.mxu0 0.0
    %282 = vmatprep.subr.mxu0 0.0
    %283 = vmatpush1.msra.mxu0 0.0
    %284 = vmatprep.subr.mxu0 0.0
    %285 = vmatpush1.msra.mxu0 0.0
    %286 = vmatprep.subr.mxu0 0.0
    %287 = vmatpush1.msra.mxu0 0.0
    %288 = vmatprep.subr.mxu0 0.0
    %289 = vmatpush1.msra.mxu0 0.0
    %290 = vmatprep.subr.mxu0 0.0
    %291 = vmatpush1.msra.mxu0 0.0
    %292 = vmatprep.subr.mxu0 0.0
    %293 = vmatpush1.msra.mxu0 0.0
    %294 = vmatprep.subr.mxu0 0.0
    %295 = vmatpush1.msra.mxu0 0.0
    %296 = vmatprep.subr.mxu0 0.0
    %297 = vmatpush1.msra.mxu0 0.0
    %298 = vmatprep.subr.mxu0 0.0
    %299 = vmatpush1.msra.mxu0 0.0
    %300 = vmatprep.subr.mxu0 0.0
    %301 = vmatpush1.msra.mxu0 0.0
    %302 = vmatprep.subr.mxu0 0.0
    %303 = vmatpush1.msra.mxu0 0.0
    %304 = vmatprep.subr.mxu0 0.0
    %305 = vmatpush1.msra.mxu0 0.0
    %306 = vmatprep.subr.mxu0 0.0
    %307 = vmatpush1.msra.mxu0 0.0
    %308 = vmatprep.subr.mxu0 0.0
    %309 = vmatpush1.msra.mxu0 0.0
    %310 = vmatprep.subr.mxu0 0.0
    %311 = vmatpush1.msra.mxu0 0.0
    %312 = vmatprep.subr.mxu0 0.0
    %313 = vmatpush1.msra.mxu0 0.0
    %314 = vmatprep.subr.mxu0 0.0
    %315 = vmatpush1.msra.mxu0 0.0
    %316 = vmatprep.subr.mxu0 0.0
    %317 = vmatpush1.msra.mxu0 0.0
    %318 = vmatprep.subr.mxu0 0.0
    %319 = vmatpush1.msra.mxu0 0.0
    %320 = vmatprep.mubr.f32.mxu0 0.0
    %321 = vmatmul.mubr.f32.gmra.mrb[0].mxu0 %v251
    %v322 = vpop.f32.mrb[0].mxu0
    %v323 = vadd.f32 %v248, %v322
    %v324 = vpop.f32.mrb[0].mxu0
    %325 = vmatprep.mubr.f32.mxu0 0.0
    %326 = vmatmul.mubr.f32.gmra.mrb[0].mxu0 %v254
    %v327 = vpop.f32.mrb[0].mxu0
    %v328 = vadd.f32 %v248, %v327
    %v329 = vpop.f32.mrb[0].mxu0
    %330 = vdwg.mxu0
    %v331 = vld [vmem:[%s9] sm:$0xff]
    %v332 = vld [vmem:[%s9 + $0x8] sm:$0xff]
    %v333 = vld [vmem:[%s9 + $0x10] sm:$0xff]
    %v334 = vld [vmem:[%s9 + $0x18] sm:$0xff]
    %v335 = vld [vmem:[%s9 + $0x20] sm:$0xff]
    %v336 = vld [vmem:[%s9 + $0x28] sm:$0xff]
    %v337 = vld [vmem:[%s9 + $0x30] sm:$0xff]
    %v338 = vld [vmem:[%s9 + $0x38] sm:$0xff]
    %v339 = vld [vmem:[%s10] sm:$0x3]
    %v341 = vlaneseq
    %v342 = vshrl.u32 %v341, 7
    %v343 = vsub.s32 0, %v342
    %v344 = vrot.slane %v339, %v343
    %v345 = vlaneseq
    %v346 = vshrl.u32 %v345, 7
    %v347 = vsub.s32 1, %v346
    %v348 = vrot.slane %v339, %v347
    %v352 = vsel %vm65, %v139, 0
    %v355 = vsel %vm65, %v144, 0
    %357 = vmatprep.subr.mxu0 %v332
    %358 = vmatpush1.msra.mxu0 %v331
    %359 = vmatprep.subr.mxu0 %v334
    %360 = vmatpush1.msra.mxu0 %v333
    %361 = vmatprep.subr.mxu0 %v336
    %362 = vmatpush1.msra.mxu0 %v335
    %363 = vmatprep.subr.mxu0 %v338
    %364 = vmatpush1.msra.mxu0 %v337
    %365 = vmatprep.subr.mxu0 0.0
    %366 = vmatpush1.msra.mxu0 0.0
    %367 = vmatprep.subr.mxu0 0.0
    %368 = vmatpush1.msra.mxu0 0.0
    %369 = vmatprep.subr.mxu0 0.0
    %370 = vmatpush1.msra.mxu0 0.0
    %371 = vmatprep.subr.mxu0 0.0
    %372 = vmatpush1.msra.mxu0 0.0
    %373 = vmatprep.subr.mxu0 0.0
    %374 = vmatpush1.msra.mxu0 0.0
    %375 = vmatprep.subr.mxu0 0.0
    %376 = vmatpush1.msra.mxu0 0.0
    %377 = vmatprep.subr.mxu0 0.0
    %378 = vmatpush1.msra.mxu0 0.0
    %379 = vmatprep.subr.mxu0 0.0
    %380 = vmatpush1.msra.mxu0 0.0
    %381 = vmatprep.subr.mxu0 0.0
    %382 = vmatpush1.msra.mxu0 0.0
    %383 = vmatprep.subr.mxu0 0.0
    %384 = vmatpush1.msra.mxu0 0.0
    %385 = vmatprep.subr.mxu0 0.0
    %386 = vmatpush1.msra.mxu0 0.0
    %387 = vmatprep.subr.mxu0 0.0
    %388 = vmatpush1.msra.mxu0 0.0
    %389 = vmatprep.subr.mxu0 0.0
    %390 = vmatpush1.msra.mxu0 0.0
    %391 = vmatprep.subr.mxu0 0.0
    %392 = vmatpush1.msra.mxu0 0.0
    %393 = vmatprep.subr.mxu0 0.0
    %394 = vmatpush1.msra.mxu0 0.0
    %395 = vmatprep.subr.mxu0 0.0
    %396 = vmatpush1.msra.mxu0 0.0
    %397 = vmatprep.subr.mxu0 0.0
    %398 = vmatpush1.msra.mxu0 0.0
    %399 = vmatprep.subr.mxu0 0.0
    %400 = vmatpush1.msra.mxu0 0.0
    %401 = vmatprep.subr.mxu0 0.0
    %402 = vmatpush1.msra.mxu0 0.0
    %403 = vmatprep.subr.mxu0 0.0
    %404 = vmatpush1.msra.mxu0 0.0
    %405 = vmatprep.subr.mxu0 0.0
    %406 = vmatpush1.msra.mxu0 0.0
    %407 = vmatprep.subr.mxu0 0.0
    %408 = vmatpush1.msra.mxu0 0.0
    %409 = vmatprep.subr.mxu0 0.0
    %410 = vmatpush1.msra.mxu0 0.0
    %411 = vmatprep.subr.mxu0 0.0
    %412 = vmatpush1.msra.mxu0 0.0
    %413 = vmatprep.subr.mxu0 0.0
    %414 = vmatpush1.msra.mxu0 0.0
    %415 = vmatprep.subr.mxu0 0.0
    %416 = vmatpush1.msra.mxu0 0.0
    %417 = vmatprep.subr.mxu0 0.0
    %418 = vmatpush1.msra.mxu0 0.0
    %419 = vmatprep.subr.mxu0 0.0
    %420 = vmatpush1.msra.mxu0 0.0
    %421 = vmatprep.mubr.f32.mxu0 0.0
    %422 = vmatmul.mubr.f32.gmra.mrb[0].mxu0 %v352
    %v423 = vpop.f32.mrb[0].mxu0
    %v424 = vadd.f32 %v344, %v423
    %v425 = vpop.f32.mrb[0].mxu0
    %v426 = vadd.f32 %v348, %v425
    %427 = vmatprep.mubr.f32.mxu0 0.0
    %428 = vmatmul.mubr.f32.gmra.mrb[0].mxu0 %v355
    %v429 = vpop.f32.mrb[0].mxu0
    %v430 = vadd.f32 %v344, %v429
    %v431 = vpop.f32.mrb[0].mxu0
    %v432 = vadd.f32 %v348, %v431
    %433 = vdwg.mxu0
    %v434 = vand.u32 2147483647, %v424
    %vm435 = vcmp.le.f32.partialorder %v434, 0.7853982
    %vm436 = vcmp.lt.s32.totalorder %v424, 0
    %v437 = vand.u32 %v424, 2139095040
    %v438 = vshrl.u32 %v437, 23
    %v439 = vsub.s32 %v438, 127
    %v440 = vand.u32 2147483647, %v424
    %v441 = vand.u32 %v440, 8388607
    %v442 = vor.u32 %v441, 8388608
    %v443 = vsub.s32 0, %v442
    %v444 = vadd.s32 %v439, 1
    %vm445 = vcmp.gt.s32.totalorder %v444, 0
    %v446 = vsel %vm445, %v444, 0
    %v447 = vshrl.u32 %v446, 5
    %v448 = vand.u32 %v446, 31
    %v449 = vsub.s32 32, %v448
    %v450 = vshrl.u32 683565275, %v449
    %v451 = vshll.u32 683565275, %v448
    %v452 = vshrl.u32 2475754826, %v449
    %v453 = vor.u32 %v451, %v452
    %v454 = vshll.u32 2475754826, %v448
    %v455 = vshrl.u32 2131351028, %v449
    %v456 = vor.u32 %v454, %v455
    %v457 = vshll.u32 2131351028, %v448
    %v458 = vshrl.u32 2102212464, %v449
    %v459 = vor.u32 %v457, %v458
    %v460 = vshll.u32 2102212464, %v448
    %v461 = vshrl.u32 920167782, %v449
    %v462 = vor.u32 %v460, %v461
    %v463 = vshll.u32 920167782, %v448
    %v464 = vshrl.u32 1326507024, %v449
    %v465 = vor.u32 %v463, %v464
    %vm466 = vcmp.lt.s32.totalorder %v447, 1
    %vm467 = vcmp.lt.s32.totalorder %v447, 2
    %vm468 = vcmp.lt.s32.totalorder %v447, 3
    %vm469 = vcmp.lt.s32.totalorder %v447, 4
    %v470 = vsel %vm466, %v450, %v453
    %v471 = vsel %vm469, %v459, 2102212464
    %v472 = vsel %vm468, %v456, %v471
    %v473 = vsel %vm467, %v470, %v472
    %v474 = vsel %vm466, %v453, %v456
    %v475 = vsel %vm469, %v462, 920167782
    %v476 = vsel %vm468, %v459, %v475
    %v477 = vsel %vm467, %v474, %v476
    %v478 = vsel %vm466, %v456, %v459
    %v479 = vsel %vm469, %v465, 1326507024
    %v480 = vsel %vm468, %v462, %v479
    %v481 = vsel %vm467, %v478, %v480
    %v482 = vshll.u32 %v442, 8
    %v483 = vmul.u32.u64.compose %v482, %v481
    %v484 = vextract.low.u32 %v483
    %v485 = vextract.high.u32 %v483
    %v486 = vmul.u32.u64.compose %v482, %v477
    %v487 = vextract.low.u32 %v486
    %v488 = vextract.high.u32 %v486
    %v489 = vmul.u32 %v482, %v473
    %v490 = vadd.s32 %v485, %v487
    %vm491 = vc.u32 %v485, %v487
    %v492 = vadd.s32 %v488, 1
    %v493 = vsel %vm491, %v492, %v488
    %v494 = vadd.s32 %v489, %v493
    %v495 = vadd.s32 %v494, 536870912
    %v496 = vshrl.u32 %v495, 30
    %v497 = vshll.u32 %v496, 30
    %v498 = vsub.s32 %v494, %v497
    %vm499 = vcmp.lt.s32.totalorder %v498, 0
    %v500 = vsub.s32 0, %v498
    %v501 = vsel %vm499, %v500, %v498
    %v502 = vclz %v501
    %v503 = vsub.s32 %v502, 2
    %vm504 = vcmp.gt.s32.totalorder 0, %v503
    %v505 = vsel %vm504, 0, %v503
    %v506 = vsub.s32 32, %v505
    %v507 = vshll.u32 %v498, %v505
    %v508 = vshrl.u32 %v490, %v506
    %v509 = vor.u32 %v507, %v508
    %v510 = vsub.s32 4294967266, %v505
    %v511 = vadd.s32 %v510, 127
    %v512 = vshll.u32 %v511, 23
    %v513 = vor.u32 4788187, %v512
    %v514 = vand.u32 2147483647, %v513
    %v516 = vcvt.s32.f32 %v509
    %v517 = vmul.f32 %v516, %v514
    %v518 = vxor.u32 %v517, 2147483648
    %v519 = vsel %vm436, %v518, %v517
    %v520 = vsub.s32 4, %v496
    %v521 = vsel %vm436, %v520, %v496
    %v522 = vsel %vm435, %v424, %v519
    %v523 = vsel %vm435, 0, %v521
    %v524 = vcosq.f32.pop %v522
    %v525 = vsinq.f32.pop %v522
    %vm526 = vweird.f32 %v424
    %v527 = vand.u32 %v523, 3
    %vm528 = vcmp.lt.s32.totalorder %v527, 2
    %vm529 = vcmp.eq.s32.totalorder %v527, 0
    %v530 = vxor.u32 %v525, 2147483648
    %v531 = vsel %vm529, %v524, %v530
    %vm532 = vcmp.eq.s32.totalorder %v527, 2
    %v533 = vxor.u32 %v524, 2147483648
    %v534 = vsel %vm532, %v533, %v525
    %v535 = vsel %vm528, %v531, %v534
    %v536 = vsel %vm526, nan, %v535
    %v537 = vand.u32 2147483647, %v426
    %vm538 = vcmp.le.f32.partialorder %v537, 0.7853982
    %vm539 = vcmp.lt.s32.totalorder %v426, 0
    %v540 = vand.u32 %v426, 2139095040
    %v541 = vshrl.u32 %v540, 23
    %v542 = vsub.s32 %v541, 127
    %v543 = vand.u32 2147483647, %v426
    %v544 = vand.u32 %v543, 8388607
    %v545 = vor.u32 %v544, 8388608
    %v546 = vsub.s32 0, %v545
    %v547 = vadd.s32 %v542, 1
    %vm548 = vcmp.gt.s32.totalorder %v547, 0
    %v549 = vsel %vm548, %v547, 0
    %v550 = vshrl.u32 %v549, 5
    %v551 = vand.u32 %v549, 31
    %v552 = vsub.s32 32, %v551
    %v553 = vshrl.u32 683565275, %v552
    %v554 = vshll.u32 683565275, %v551
    %v555 = vshrl.u32 2475754826, %v552
    %v556 = vor.u32 %v554, %v555
    %v557 = vshll.u32 2475754826, %v551
    %v558 = vshrl.u32 2131351028, %v552
    %v559 = vor.u32 %v557, %v558
    %v560 = vshll.u32 2131351028, %v551
    %v561 = vshrl.u32 2102212464, %v552
    %v562 = vor.u32 %v560, %v561
    %v563 = vshll.u32 2102212464, %v551
    %v564 = vshrl.u32 920167782, %v552
    %v565 = vor.u32 %v563, %v564
    %v566 = vshll.u32 920167782, %v551
    %v567 = vshrl.u32 1326507024, %v552
    %v568 = vor.u32 %v566, %v567
    %vm569 = vcmp.lt.s32.totalorder %v550, 1
    %vm570 = vcmp.lt.s32.totalorder %v550, 2
    %vm571 = vcmp.lt.s32.totalorder %v550, 3
    %vm572 = vcmp.lt.s32.totalorder %v550, 4
    %v573 = vsel %vm569, %v553, %v556
    %v574 = vsel %vm572, %v562, 2102212464
    %v575 = vsel %vm571, %v559, %v574
    %v576 = vsel %vm570, %v573, %v575
    %v577 = vsel %vm569, %v556, %v559
    %v578 = vsel %vm572, %v565, 920167782
    %v579 = vsel %vm571, %v562, %v578
    %v580 = vsel %vm570, %v577, %v579
    %v581 = vsel %vm569, %v559, %v562
    %v582 = vsel %vm572, %v568, 1326507024
    %v583 = vsel %vm571, %v565, %v582
    %v584 = vsel %vm570, %v581, %v583
    %v585 = vshll.u32 %v545, 8
    %v586 = vmul.u32.u64.compose %v585, %v584
    %v587 = vextract.low.u32 %v586
    %v588 = vextract.high.u32 %v586
    %v589 = vmul.u32.u64.compose %v585, %v580
    %v590 = vextract.low.u32 %v589
    %v591 = vextract.high.u32 %v589
    %v592 = vmul.u32 %v585, %v576
    %v593 = vadd.s32 %v588, %v590
    %vm594 = vc.u32 %v588, %v590
    %v595 = vadd.s32 %v591, 1
    %v596 = vsel %vm594, %v595, %v591
    %v597 = vadd.s32 %v592, %v596
    %v598 = vadd.s32 %v597, 536870912
    %v599 = vshrl.u32 %v598, 30
    %v600 = vshll.u32 %v599, 30
    %v601 = vsub.s32 %v597, %v600
    %vm602 = vcmp.lt.s32.totalorder %v601, 0
    %v603 = vsub.s32 0, %v601
    %v604 = vsel %vm602, %v603, %v601
    %v605 = vclz %v604
    %v606 = vsub.s32 %v605, 2
    %vm607 = vcmp.gt.s32.totalorder 0, %v606
    %v608 = vsel %vm607, 0, %v606
    %v609 = vsub.s32 32, %v608
    %v610 = vshll.u32 %v601, %v608
    %v611 = vshrl.u32 %v593, %v609
    %v612 = vor.u32 %v610, %v611
    %v613 = vsub.s32 4294967266, %v608
    %v614 = vadd.s32 %v613, 127
    %v615 = vshll.u32 %v614, 23
    %v616 = vor.u32 4788187, %v615
    %v617 = vand.u32 2147483647, %v616
    %v619 = vcvt.s32.f32 %v612
    %v620 = vmul.f32 %v619, %v617
    %v621 = vxor.u32 %v620, 2147483648
    %v622 = vsel %vm539, %v621, %v620
    %v623 = vsub.s32 4, %v599
    %v624 = vsel %vm539, %v623, %v599
    %v625 = vsel %vm538, %v426, %v622
    %v626 = vsel %vm538, 0, %v624
    %v627 = vcosq.f32.pop %v625
    %v628 = vsinq.f32.pop %v625
    %vm629 = vweird.f32 %v426
    %v630 = vand.u32 %v626, 3
    %vm631 = vcmp.lt.s32.totalorder %v630, 2
    %vm632 = vcmp.eq.s32.totalorder %v630, 0
    %v633 = vxor.u32 %v628, 2147483648
    %v634 = vsel %vm632, %v627, %v633
    %vm635 = vcmp.eq.s32.totalorder %v630, 2
    %v636 = vxor.u32 %v627, 2147483648
    %v637 = vsel %vm635, %v636, %v628
    %v638 = vsel %vm631, %v634, %v637
    %v639 = vsel %vm629, nan, %v638
    %v640 = vand.u32 2147483647, %v430
    %vm641 = vcmp.le.f32.partialorder %v640, 0.7853982
    %vm642 = vcmp.lt.s32.totalorder %v430, 0
    %v643 = vand.u32 %v430, 2139095040
    %v644 = vshrl.u32 %v643, 23
    %v645 = vsub.s32 %v644, 127
    %v646 = vand.u32 2147483647, %v430
    %v647 = vand.u32 %v646, 8388607
    %v648 = vor.u32 %v647, 8388608
    %v649 = vsub.s32 0, %v648
    %v650 = vadd.s32 %v645, 1
    %vm651 = vcmp.gt.s32.totalorder %v650, 0
    %v652 = vsel %vm651, %v650, 0
    %v653 = vshrl.u32 %v652, 5
    %v654 = vand.u32 %v652, 31
    %v655 = vsub.s32 32, %v654
    %v656 = vshrl.u32 683565275, %v655
    %v657 = vshll.u32 683565275, %v654
    %v658 = vshrl.u32 2475754826, %v655
    %v659 = vor.u32 %v657, %v658
    %v660 = vshll.u32 2475754826, %v654
    %v661 = vshrl.u32 2131351028, %v655
    %v662 = vor.u32 %v660, %v661
    %v663 = vshll.u32 2131351028, %v654
    %v664 = vshrl.u32 2102212464, %v655
    %v665 = vor.u32 %v663, %v664
    %v666 = vshll.u32 2102212464, %v654
    %v667 = vshrl.u32 920167782, %v655
    %v668 = vor.u32 %v666, %v667
    %v669 = vshll.u32 920167782, %v654
    %v670 = vshrl.u32 1326507024, %v655
    %v671 = vor.u32 %v669, %v670
    %vm672 = vcmp.lt.s32.totalorder %v653, 1
    %vm673 = vcmp.lt.s32.totalorder %v653, 2
    %vm674 = vcmp.lt.s32.totalorder %v653, 3
    %vm675 = vcmp.lt.s32.totalorder %v653, 4
    %v676 = vsel %vm672, %v656, %v659
    %v677 = vsel %vm675, %v665, 2102212464
    %v678 = vsel %vm674, %v662, %v677
    %v679 = vsel %vm673, %v676, %v678
    %v680 = vsel %vm672, %v659, %v662
    %v681 = vsel %vm675, %v668, 920167782
    %v682 = vsel %vm674, %v665, %v681
    %v683 = vsel %vm673, %v680, %v682
    %v684 = vsel %vm672, %v662, %v665
    %v685 = vsel %vm675, %v671, 1326507024
    %v686 = vsel %vm674, %v668, %v685
    %v687 = vsel %vm673, %v684, %v686
    %v688 = vshll.u32 %v648, 8
    %v689 = vmul.u32.u64.compose %v688, %v687
    %v690 = vextract.low.u32 %v689
    %v691 = vextract.high.u32 %v689
    %v692 = vmul.u32.u64.compose %v688, %v683
    %v693 = vextract.low.u32 %v692
    %v694 = vextract.high.u32 %v692
    %v695 = vmul.u32 %v688, %v679
    %v696 = vadd.s32 %v691, %v693
    %vm697 = vc.u32 %v691, %v693
    %v698 = vadd.s32 %v694, 1
    %v699 = vsel %vm697, %v698, %v694
    %v700 = vadd.s32 %v695, %v699
    %v701 = vadd.s32 %v700, 536870912
    %v702 = vshrl.u32 %v701, 30
    %v703 = vshll.u32 %v702, 30
    %v704 = vsub.s32 %v700, %v703
    %vm705 = vcmp.lt.s32.totalorder %v704, 0
    %v706 = vsub.s32 0, %v704
    %v707 = vsel %vm705, %v706, %v704
    %v708 = vclz %v707
    %v709 = vsub.s32 %v708, 2
    %vm710 = vcmp.gt.s32.totalorder 0, %v709
    %v711 = vsel %vm710, 0, %v709
    %v712 = vsub.s32 32, %v711
    %v713 = vshll.u32 %v704, %v711
    %v714 = vshrl.u32 %v696, %v712
    %v715 = vor.u32 %v713, %v714
    %v716 = vsub.s32 4294967266, %v711
    %v717 = vadd.s32 %v716, 127
    %v718 = vshll.u32 %v717, 23
    %v719 = vor.u32 4788187, %v718
    %v720 = vand.u32 2147483647, %v719
    %v722 = vcvt.s32.f32 %v715
    %v723 = vmul.f32 %v722, %v720
    %v724 = vxor.u32 %v723, 2147483648
    %v725 = vsel %vm642, %v724, %v723
    %v726 = vsub.s32 4, %v702
    %v727 = vsel %vm642, %v726, %v702
    %v728 = vsel %vm641, %v430, %v725
    %v729 = vsel %vm641, 0, %v727
    %v730 = vcosq.f32.pop %v728
    %v731 = vsinq.f32.pop %v728
    %vm732 = vweird.f32 %v430
    %v733 = vand.u32 %v729, 3
    %vm734 = vcmp.lt.s32.totalorder %v733, 2
    %vm735 = vcmp.eq.s32.totalorder %v733, 0
    %v736 = vxor.u32 %v731, 2147483648
    %v737 = vsel %vm735, %v730, %v736
    %vm738 = vcmp.eq.s32.totalorder %v733, 2
    %v739 = vxor.u32 %v730, 2147483648
    %v740 = vsel %vm738, %v739, %v731
    %v741 = vsel %vm734, %v737, %v740
    %v742 = vsel %vm732, nan, %v741
    %v743 = vand.u32 2147483647, %v432
    %vm744 = vcmp.le.f32.partialorder %v743, 0.7853982
    %vm745 = vcmp.lt.s32.totalorder %v432, 0
    %v746 = vand.u32 %v432, 2139095040
    %v747 = vshrl.u32 %v746, 23
    %v748 = vsub.s32 %v747, 127
    %v749 = vand.u32 2147483647, %v432
    %v750 = vand.u32 %v749, 8388607
    %v751 = vor.u32 %v750, 8388608
    %v752 = vsub.s32 0, %v751
    %v753 = vadd.s32 %v748, 1
    %vm754 = vcmp.gt.s32.totalorder %v753, 0
    %v755 = vsel %vm754, %v753, 0
    %v756 = vshrl.u32 %v755, 5
    %v757 = vand.u32 %v755, 31
    %v758 = vsub.s32 32, %v757
    %v759 = vshrl.u32 683565275, %v758
    %v760 = vshll.u32 683565275, %v757
    %v761 = vshrl.u32 2475754826, %v758
    %v762 = vor.u32 %v760, %v761
    %v763 = vshll.u32 2475754826, %v757
    %v764 = vshrl.u32 2131351028, %v758
    %v765 = vor.u32 %v763, %v764
    %v766 = vshll.u32 2131351028, %v757
    %v767 = vshrl.u32 2102212464, %v758
    %v768 = vor.u32 %v766, %v767
    %v769 = vshll.u32 2102212464, %v757
    %v770 = vshrl.u32 920167782, %v758
    %v771 = vor.u32 %v769, %v770
    %v772 = vshll.u32 920167782, %v757
    %v773 = vshrl.u32 1326507024, %v758
    %v774 = vor.u32 %v772, %v773
    %vm775 = vcmp.lt.s32.totalorder %v756, 1
    %vm776 = vcmp.lt.s32.totalorder %v756, 2
    %vm777 = vcmp.lt.s32.totalorder %v756, 3
    %vm778 = vcmp.lt.s32.totalorder %v756, 4
    %v779 = vsel %vm775, %v759, %v762
    %v780 = vsel %vm778, %v768, 2102212464
    %v781 = vsel %vm777, %v765, %v780
    %v782 = vsel %vm776, %v779, %v781
    %v783 = vsel %vm775, %v762, %v765
    %v784 = vsel %vm778, %v771, 920167782
    %v785 = vsel %vm777, %v768, %v784
    %v786 = vsel %vm776, %v783, %v785
    %v787 = vsel %vm775, %v765, %v768
    %v788 = vsel %vm778, %v774, 1326507024
    %v789 = vsel %vm777, %v771, %v788
    %v790 = vsel %vm776, %v787, %v789
    %v791 = vshll.u32 %v751, 8
    %v792 = vmul.u32.u64.compose %v791, %v790
    %v793 = vextract.low.u32 %v792
    %v794 = vextract.high.u32 %v792
    %v795 = vmul.u32.u64.compose %v791, %v786
    %v796 = vextract.low.u32 %v795
    %v797 = vextract.high.u32 %v795
    %v798 = vmul.u32 %v791, %v782
    %v799 = vadd.s32 %v794, %v796
    %vm800 = vc.u32 %v794, %v796
    %v801 = vadd.s32 %v797, 1
    %v802 = vsel %vm800, %v801, %v797
    %v803 = vadd.s32 %v798, %v802
    %v804 = vadd.s32 %v803, 536870912
    %v805 = vshrl.u32 %v804, 30
    %v806 = vshll.u32 %v805, 30
    %v807 = vsub.s32 %v803, %v806
    %vm808 = vcmp.lt.s32.totalorder %v807, 0
    %v809 = vsub.s32 0, %v807
    %v810 = vsel %vm808, %v809, %v807
    %v811 = vclz %v810
    %v812 = vsub.s32 %v811, 2
    %vm813 = vcmp.gt.s32.totalorder 0, %v812
    %v814 = vsel %vm813, 0, %v812
    %v815 = vsub.s32 32, %v814
    %v816 = vshll.u32 %v807, %v814
    %v817 = vshrl.u32 %v799, %v815
    %v818 = vor.u32 %v816, %v817
    %v819 = vsub.s32 4294967266, %v814
    %v820 = vadd.s32 %v819, 127
    %v821 = vshll.u32 %v820, 23
    %v822 = vor.u32 4788187, %v821
    %v823 = vand.u32 2147483647, %v822
    %v825 = vcvt.s32.f32 %v818
    %v826 = vmul.f32 %v825, %v823
    %v827 = vxor.u32 %v826, 2147483648
    %v828 = vsel %vm745, %v827, %v826
    %v829 = vsub.s32 4, %v805
    %v830 = vsel %vm745, %v829, %v805
    %v831 = vsel %vm744, %v432, %v828
    %v832 = vsel %vm744, 0, %v830
    %v833 = vcosq.f32.pop %v831
    %v834 = vsinq.f32.pop %v831
    %vm835 = vweird.f32 %v432
    %v836 = vand.u32 %v832, 3
    %vm837 = vcmp.lt.s32.totalorder %v836, 2
    %vm838 = vcmp.eq.s32.totalorder %v836, 0
    %v839 = vxor.u32 %v834, 2147483648
    %v840 = vsel %vm838, %v833, %v839
    %vm841 = vcmp.eq.s32.totalorder %v836, 2
    %v842 = vxor.u32 %v833, 2147483648
    %v843 = vsel %vm841, %v842, %v834
    %v844 = vsel %vm837, %v840, %v843
    %v845 = vsel %vm835, nan, %v844
    %v847 = vsel %vm65, %v231, 0
    %v850 = vsel %vm65, %v236, 0
    %852 = vmatprep.subr.mxu0 %v332
    %853 = vmatpush1.msra.mxu0 %v331
    %854 = vmatprep.subr.mxu0 %v334
    %855 = vmatpush1.msra.mxu0 %v333
    %856 = vmatprep.subr.mxu0 %v336
    %857 = vmatpush1.msra.mxu0 %v335
    %858 = vmatprep.subr.mxu0 %v338
    %859 = vmatpush1.msra.mxu0 %v337
    %860 = vmatprep.subr.mxu0 0.0
    %861 = vmatpush1.msra.mxu0 0.0
    %862 = vmatprep.subr.mxu0 0.0
    %863 = vmatpush1.msra.mxu0 0.0
    %864 = vmatprep.subr.mxu0 0.0
    %865 = vmatpush1.msra.mxu0 0.0
    %866 = vmatprep.subr.mxu0 0.0
    %867 = vmatpush1.msra.mxu0 0.0
    %868 = vmatprep.subr.mxu0 0.0
    %869 = vmatpush1.msra.mxu0 0.0
    %870 = vmatprep.subr.mxu0 0.0
    %871 = vmatpush1.msra.mxu0 0.0
    %872 = vmatprep.subr.mxu0 0.0
    %873 = vmatpush1.msra.mxu0 0.0
    %874 = vmatprep.subr.mxu0 0.0
    %875 = vmatpush1.msra.mxu0 0.0
    %876 = vmatprep.subr.mxu0 0.0
    %877 = vmatpush1.msra.mxu0 0.0
    %878 = vmatprep.subr.mxu0 0.0
    %879 = vmatpush1.msra.mxu0 0.0
    %880 = vmatprep.subr.mxu0 0.0
    %881 = vmatpush1.msra.mxu0 0.0
    %882 = vmatprep.subr.mxu0 0.0
    %883 = vmatpush1.msra.mxu0 0.0
    %884 = vmatprep.subr.mxu0 0.0
    %885 = vmatpush1.msra.mxu0 0.0
    %886 = vmatprep.subr.mxu0 0.0
    %887 = vmatpush1.msra.mxu0 0.0
    %888 = vmatprep.subr.mxu0 0.0
    %889 = vmatpush1.msra.mxu0 0.0
    %890 = vmatprep.subr.mxu0 0.0
    %891 = vmatpush1.msra.mxu0 0.0
    %892 = vmatprep.subr.mxu0 0.0
    %893 = vmatpush1.msra.mxu0 0.0
    %894 = vmatprep.subr.mxu0 0.0
    %895 = vmatpush1.msra.mxu0 0.0
    %896 = vmatprep.subr.mxu0 0.0
    %897 = vmatpush1.msra.mxu0 0.0
    %898 = vmatprep.subr.mxu0 0.0
    %899 = vmatpush1.msra.mxu0 0.0
    %900 = vmatprep.subr.mxu0 0.0
    %901 = vmatpush1.msra.mxu0 0.0
    %902 = vmatprep.subr.mxu0 0.0
    %903 = vmatpush1.msra.mxu0 0.0
    %904 = vmatprep.subr.mxu0 0.0
    %905 = vmatpush1.msra.mxu0 0.0
    %906 = vmatprep.subr.mxu0 0.0
    %907 = vmatpush1.msra.mxu0 0.0
    %908 = vmatprep.subr.mxu0 0.0
    %909 = vmatpush1.msra.mxu0 0.0
    %910 = vmatprep.subr.mxu0 0.0
    %911 = vmatpush1.msra.mxu0 0.0
    %912 = vmatprep.subr.mxu0 0.0
    %913 = vmatpush1.msra.mxu0 0.0
    %914 = vmatprep.subr.mxu0 0.0
    %915 = vmatpush1.msra.mxu0 0.0
    %916 = vmatprep.mubr.f32.mxu0 0.0
    %917 = vmatmul.mubr.f32.gmra.mrb[0].mxu0 %v847
    %v918 = vpop.f32.mrb[0].mxu0
    %v919 = vadd.f32 %v344, %v918
    %v920 = vpop.f32.mrb[0].mxu0
    %v921 = vadd.f32 %v348, %v920
    %922 = vmatprep.mubr.f32.mxu0 0.0
    %923 = vmatmul.mubr.f32.gmra.mrb[0].mxu0 %v850
    %v924 = vpop.f32.mrb[0].mxu0
    %v925 = vadd.f32 %v344, %v924
    %v926 = vpop.f32.mrb[0].mxu0
    %v927 = vadd.f32 %v348, %v926
    %928 = vdwg.mxu0
    %v929 = vand.u32 2147483647, %v919
    %vm930 = vcmp.le.f32.partialorder %v929, 0.7853982
    %vm931 = vcmp.lt.s32.totalorder %v919, 0
    %v932 = vand.u32 %v919, 2139095040
    %v933 = vshrl.u32 %v932, 23
    %v934 = vsub.s32 %v933, 127
    %v935 = vand.u32 2147483647, %v919
    %v936 = vand.u32 %v935, 8388607
    %v937 = vor.u32 %v936, 8388608
    %v938 = vsub.s32 0, %v937
    %v939 = vadd.s32 %v934, 1
    %vm940 = vcmp.gt.s32.totalorder %v939, 0
    %v941 = vsel %vm940, %v939, 0
    %v942 = vshrl.u32 %v941, 5
    %v943 = vand.u32 %v941, 31
    %v944 = vsub.s32 32, %v943
    %v945 = vshrl.u32 683565275, %v944
    %v946 = vshll.u32 683565275, %v943
    %v947 = vshrl.u32 2475754826, %v944
    %v948 = vor.u32 %v946, %v947
    %v949 = vshll.u32 2475754826, %v943
    %v950 = vshrl.u32 2131351028, %v944
    %v951 = vor.u32 %v949, %v950
    %v952 = vshll.u32 2131351028, %v943
    %v953 = vshrl.u32 2102212464, %v944
    %v954 = vor.u32 %v952, %v953
    %v955 = vshll.u32 2102212464, %v943
    %v956 = vshrl.u32 920167782, %v944
    %v957 = vor.u32 %v955, %v956
    %v958 = vshll.u32 920167782, %v943
    %v959 = vshrl.u32 1326507024, %v944
    %v960 = vor.u32 %v958, %v959
    %vm961 = vcmp.lt.s32.totalorder %v942, 1
    %vm962 = vcmp.lt.s32.totalorder %v942, 2
    %vm963 = vcmp.lt.s32.totalorder %v942, 3
    %vm964 = vcmp.lt.s32.totalorder %v942, 4
    %v965 = vsel %vm961, %v945, %v948
    %v966 = vsel %vm964, %v954, 2102212464
    %v967 = vsel %vm963, %v951, %v966
    %v968 = vsel %vm962, %v965, %v967
    %v969 = vsel %vm961, %v948, %v951
    %v970 = vsel %vm964, %v957, 920167782
    %v971 = vsel %vm963, %v954, %v970
    %v972 = vsel %vm962, %v969, %v971
    %v973 = vsel %vm961, %v951, %v954
    %v974 = vsel %vm964, %v960, 1326507024
    %v975 = vsel %vm963, %v957, %v974
    %v976 = vsel %vm962, %v973, %v975
    %v977 = vshll.u32 %v937, 8
    %v978 = vmul.u32.u64.compose %v977, %v976
    %v979 = vextract.low.u32 %v978
    %v980 = vextract.high.u32 %v978
    %v981 = vmul.u32.u64.compose %v977, %v972
    %v982 = vextract.low.u32 %v981
    %v983 = vextract.high.u32 %v981
    %v984 = vmul.u32 %v977, %v968
    %v985 = vadd.s32 %v980, %v982
    %vm986 = vc.u32 %v980, %v982
    %v987 = vadd.s32 %v983, 1
    %v988 = vsel %vm986, %v987, %v983
    %v989 = vadd.s32 %v984, %v988
    %v990 = vadd.s32 %v989, 536870912
    %v991 = vshrl.u32 %v990, 30
    %v992 = vshll.u32 %v991, 30
    %v993 = vsub.s32 %v989, %v992
    %vm994 = vcmp.lt.s32.totalorder %v993, 0
    %v995 = vsub.s32 0, %v993
    %v996 = vsel %vm994, %v995, %v993
    %v997 = vclz %v996
    %v998 = vsub.s32 %v997, 2
    %vm999 = vcmp.gt.s32.totalorder 0, %v998
    %v1000 = vsel %vm999, 0, %v998
    %v1001 = vsub.s32 32, %v1000
    %v1002 = vshll.u32 %v993, %v1000
    %v1003 = vshrl.u32 %v985, %v1001
    %v1004 = vor.u32 %v1002, %v1003
    %v1005 = vsub.s32 4294967266, %v1000
    %v1006 = vadd.s32 %v1005, 127
    %v1007 = vshll.u32 %v1006, 23
    %v1008 = vor.u32 4788187, %v1007
    %v1009 = vand.u32 2147483647, %v1008
    %v1011 = vcvt.s32.f32 %v1004
    %v1012 = vmul.f32 %v1011, %v1009
    %v1013 = vxor.u32 %v1012, 2147483648
    %v1014 = vsel %vm931, %v1013, %v1012
    %v1015 = vsub.s32 4, %v991
    %v1016 = vsel %vm931, %v1015, %v991
    %v1017 = vsel %vm930, %v919, %v1014
    %v1018 = vsel %vm930, 0, %v1016
    %v1019 = vcosq.f32.pop %v1017
    %v1020 = vsinq.f32.pop %v1017
    %vm1021 = vweird.f32 %v919
    %v1022 = vand.u32 %v1018, 3
    %vm1023 = vcmp.lt.s32.totalorder %v1022, 2
    %vm1024 = vcmp.eq.s32.totalorder %v1022, 0
    %v1025 = vxor.u32 %v1020, 2147483648
    %v1026 = vsel %vm1024, %v1019, %v1025
    %vm1027 = vcmp.eq.s32.totalorder %v1022, 2
    %v1028 = vxor.u32 %v1019, 2147483648
    %v1029 = vsel %vm1027, %v1028, %v1020
    %v1030 = vsel %vm1023, %v1026, %v1029
    %v1031 = vsel %vm1021, nan, %v1030
    %v1032 = vand.u32 2147483647, %v921
    %vm1033 = vcmp.le.f32.partialorder %v1032, 0.7853982
    %vm1034 = vcmp.lt.s32.totalorder %v921, 0
    %v1035 = vand.u32 %v921, 2139095040
    %v1036 = vshrl.u32 %v1035, 23
    %v1037 = vsub.s32 %v1036, 127
    %v1038 = vand.u32 2147483647, %v921
    %v1039 = vand.u32 %v1038, 8388607
    %v1040 = vor.u32 %v1039, 8388608
    %v1041 = vsub.s32 0, %v1040
    %v1042 = vadd.s32 %v1037, 1
    %vm1043 = vcmp.gt.s32.totalorder %v1042, 0
    %v1044 = vsel %vm1043, %v1042, 0
    %v1045 = vshrl.u32 %v1044, 5
    %v1046 = vand.u32 %v1044, 31
    %v1047 = vsub.s32 32, %v1046
    %v1048 = vshrl.u32 683565275, %v1047
    %v1049 = vshll.u32 683565275, %v1046
    %v1050 = vshrl.u32 2475754826, %v1047
    %v1051 = vor.u32 %v1049, %v1050
    %v1052 = vshll.u32 2475754826, %v1046
    %v1053 = vshrl.u32 2131351028, %v1047
    %v1054 = vor.u32 %v1052, %v1053
    %v1055 = vshll.u32 2131351028, %v1046
    %v1056 = vshrl.u32 2102212464, %v1047
    %v1057 = vor.u32 %v1055, %v1056
    %v1058 = vshll.u32 2102212464, %v1046
    %v1059 = vshrl.u32 920167782, %v1047
    %v1060 = vor.u32 %v1058, %v1059
    %v1061 = vshll.u32 920167782, %v1046
    %v1062 = vshrl.u32 1326507024, %v1047
    %v1063 = vor.u32 %v1061, %v1062
    %vm1064 = vcmp.lt.s32.totalorder %v1045, 1
    %vm1065 = vcmp.lt.s32.totalorder %v1045, 2
    %vm1066 = vcmp.lt.s32.totalorder %v1045, 3
    %vm1067 = vcmp.lt.s32.totalorder %v1045, 4
    %v1068 = vsel %vm1064, %v1048, %v1051
    %v1069 = vsel %vm1067, %v1057, 2102212464
    %v1070 = vsel %vm1066, %v1054, %v1069
    %v1071 = vsel %vm1065, %v1068, %v1070
    %v1072 = vsel %vm1064, %v1051, %v1054
    %v1073 = vsel %vm1067, %v1060, 920167782
    %v1074 = vsel %vm1066, %v1057, %v1073
    %v1075 = vsel %vm1065, %v1072, %v1074
    %v1076 = vsel %vm1064, %v1054, %v1057
    %v1077 = vsel %vm1067, %v1063, 1326507024
    %v1078 = vsel %vm1066, %v1060, %v1077
    %v1079 = vsel %vm1065, %v1076, %v1078
    %v1080 = vshll.u32 %v1040, 8
    %v1081 = vmul.u32.u64.compose %v1080, %v1079
    %v1082 = vextract.low.u32 %v1081
    %v1083 = vextract.high.u32 %v1081
    %v1084 = vmul.u32.u64.compose %v1080, %v1075
    %v1085 = vextract.low.u32 %v1084
    %v1086 = vextract.high.u32 %v1084
    %v1087 = vmul.u32 %v1080, %v1071
    %v1088 = vadd.s32 %v1083, %v1085
    %vm1089 = vc.u32 %v1083, %v1085
    %v1090 = vadd.s32 %v1086, 1
    %v1091 = vsel %vm1089, %v1090, %v1086
    %v1092 = vadd.s32 %v1087, %v1091
    %v1093 = vadd.s32 %v1092, 536870912
    %v1094 = vshrl.u32 %v1093, 30
    %v1095 = vshll.u32 %v1094, 30
    %v1096 = vsub.s32 %v1092, %v1095
    %vm1097 = vcmp.lt.s32.totalorder %v1096, 0
    %v1098 = vsub.s32 0, %v1096
    %v1099 = vsel %vm1097, %v1098, %v1096
    %v1100 = vclz %v1099
    %v1101 = vsub.s32 %v1100, 2
    %vm1102 = vcmp.gt.s32.totalorder 0, %v1101
    %v1103 = vsel %vm1102, 0, %v1101
    %v1104 = vsub.s32 32, %v1103
    %v1105 = vshll.u32 %v1096, %v1103
    %v1106 = vshrl.u32 %v1088, %v1104
    %v1107 = vor.u32 %v1105, %v1106
    %v1108 = vsub.s32 4294967266, %v1103
    %v1109 = vadd.s32 %v1108, 127
    %v1110 = vshll.u32 %v1109, 23
    %v1111 = vor.u32 4788187, %v1110
    %v1112 = vand.u32 2147483647, %v1111
    %v1114 = vcvt.s32.f32 %v1107
    %v1115 = vmul.f32 %v1114, %v1112
    %v1116 = vxor.u32 %v1115, 2147483648
    %v1117 = vsel %vm1034, %v1116, %v1115
    %v1118 = vsub.s32 4, %v1094
    %v1119 = vsel %vm1034, %v1118, %v1094
    %v1120 = vsel %vm1033, %v921, %v1117
    %v1121 = vsel %vm1033, 0, %v1119
    %v1122 = vcosq.f32.pop %v1120
    %v1123 = vsinq.f32.pop %v1120
    %vm1124 = vweird.f32 %v921
    %v1125 = vand.u32 %v1121, 3
    %vm1126 = vcmp.lt.s32.totalorder %v1125, 2
    %vm1127 = vcmp.eq.s32.totalorder %v1125, 0
    %v1128 = vxor.u32 %v1123, 2147483648
    %v1129 = vsel %vm1127, %v1122, %v1128
    %vm1130 = vcmp.eq.s32.totalorder %v1125, 2
    %v1131 = vxor.u32 %v1122, 2147483648
    %v1132 = vsel %vm1130, %v1131, %v1123
    %v1133 = vsel %vm1126, %v1129, %v1132
    %v1134 = vsel %vm1124, nan, %v1133
    %v1135 = vand.u32 2147483647, %v925
    %vm1136 = vcmp.le.f32.partialorder %v1135, 0.7853982
    %vm1137 = vcmp.lt.s32.totalorder %v925, 0
    %v1138 = vand.u32 %v925, 2139095040
    %v1139 = vshrl.u32 %v1138, 23
    %v1140 = vsub.s32 %v1139, 127
    %v1141 = vand.u32 2147483647, %v925
    %v1142 = vand.u32 %v1141, 8388607
    %v1143 = vor.u32 %v1142, 8388608
    %v1144 = vsub.s32 0, %v1143
    %v1145 = vadd.s32 %v1140, 1
    %vm1146 = vcmp.gt.s32.totalorder %v1145, 0
    %v1147 = vsel %vm1146, %v1145, 0
    %v1148 = vshrl.u32 %v1147, 5
    %v1149 = vand.u32 %v1147, 31
    %v1150 = vsub.s32 32, %v1149
    %v1151 = vshrl.u32 683565275, %v1150
    %v1152 = vshll.u32 683565275, %v1149
    %v1153 = vshrl.u32 2475754826, %v1150
    %v1154 = vor.u32 %v1152, %v1153
    %v1155 = vshll.u32 2475754826, %v1149
    %v1156 = vshrl.u32 2131351028, %v1150
    %v1157 = vor.u32 %v1155, %v1156
    %v1158 = vshll.u32 2131351028, %v1149
    %v1159 = vshrl.u32 2102212464, %v1150
    %v1160 = vor.u32 %v1158, %v1159
    %v1161 = vshll.u32 2102212464, %v1149
    %v1162 = vshrl.u32 920167782, %v1150
    %v1163 = vor.u32 %v1161, %v1162
    %v1164 = vshll.u32 920167782, %v1149
    %v1165 = vshrl.u32 1326507024, %v1150
    %v1166 = vor.u32 %v1164, %v1165
    %vm1167 = vcmp.lt.s32.totalorder %v1148, 1
    %vm1168 = vcmp.lt.s32.totalorder %v1148, 2
    %vm1169 = vcmp.lt.s32.totalorder %v1148, 3
    %vm1170 = vcmp.lt.s32.totalorder %v1148, 4
    %v1171 = vsel %vm1167, %v1151, %v1154
    %v1172 = vsel %vm1170, %v1160, 2102212464
    %v1173 = vsel %vm1169, %v1157, %v1172
    %v1174 = vsel %vm1168, %v1171, %v1173
    %v1175 = vsel %vm1167, %v1154, %v1157
    %v1176 = vsel %vm1170, %v1163, 920167782
    %v1177 = vsel %vm1169, %v1160, %v1176
    %v1178 = vsel %vm1168, %v1175, %v1177
    %v1179 = vsel %vm1167, %v1157, %v1160
    %v1180 = vsel %vm1170, %v1166, 1326507024
    %v1181 = vsel %vm1169, %v1163, %v1180
    %v1182 = vsel %vm1168, %v1179, %v1181
    %v1183 = vshll.u32 %v1143, 8
    %v1184 = vmul.u32.u64.compose %v1183, %v1182
    %v1185 = vextract.low.u32 %v1184
    %v1186 = vextract.high.u32 %v1184
    %v1187 = vmul.u32.u64.compose %v1183, %v1178
    %v1188 = vextract.low.u32 %v1187
    %v1189 = vextract.high.u32 %v1187
    %v1190 = vmul.u32 %v1183, %v1174
    %v1191 = vadd.s32 %v1186, %v1188
    %vm1192 = vc.u32 %v1186, %v1188
    %v1193 = vadd.s32 %v1189, 1
    %v1194 = vsel %vm1192, %v1193, %v1189
    %v1195 = vadd.s32 %v1190, %v1194
    %v1196 = vadd.s32 %v1195, 536870912
    %v1197 = vshrl.u32 %v1196, 30
    %v1198 = vshll.u32 %v1197, 30
    %v1199 = vsub.s32 %v1195, %v1198
    %vm1200 = vcmp.lt.s32.totalorder %v1199, 0
    %v1201 = vsub.s32 0, %v1199
    %v1202 = vsel %vm1200, %v1201, %v1199
    %v1203 = vclz %v1202
    %v1204 = vsub.s32 %v1203, 2
    %vm1205 = vcmp.gt.s32.totalorder 0, %v1204
    %v1206 = vsel %vm1205, 0, %v1204
    %v1207 = vsub.s32 32, %v1206
    %v1208 = vshll.u32 %v1199, %v1206
    %v1209 = vshrl.u32 %v1191, %v1207
    %v1210 = vor.u32 %v1208, %v1209
    %v1211 = vsub.s32 4294967266, %v1206
    %v1212 = vadd.s32 %v1211, 127
    %v1213 = vshll.u32 %v1212, 23
    %v1214 = vor.u32 4788187, %v1213
    %v1215 = vand.u32 2147483647, %v1214
    %v1217 = vcvt.s32.f32 %v1210
    %v1218 = vmul.f32 %v1217, %v1215
    %v1219 = vxor.u32 %v1218, 2147483648
    %v1220 = vsel %vm1137, %v1219, %v1218
    %v1221 = vsub.s32 4, %v1197
    %v1222 = vsel %vm1137, %v1221, %v1197
    %v1223 = vsel %vm1136, %v925, %v1220
    %v1224 = vsel %vm1136, 0, %v1222
    %v1225 = vcosq.f32.pop %v1223
    %v1226 = vsinq.f32.pop %v1223
    %vm1227 = vweird.f32 %v925
    %v1228 = vand.u32 %v1224, 3
    %vm1229 = vcmp.lt.s32.totalorder %v1228, 2
    %vm1230 = vcmp.eq.s32.totalorder %v1228, 0
    %v1231 = vxor.u32 %v1226, 2147483648
    %v1232 = vsel %vm1230, %v1225, %v1231
    %vm1233 = vcmp.eq.s32.totalorder %v1228, 2
    %v1234 = vxor.u32 %v1225, 2147483648
    %v1235 = vsel %vm1233, %v1234, %v1226
    %v1236 = vsel %vm1229, %v1232, %v1235
    %v1237 = vsel %vm1227, nan, %v1236
    %v1238 = vand.u32 2147483647, %v927
    %vm1239 = vcmp.le.f32.partialorder %v1238, 0.7853982
    %vm1240 = vcmp.lt.s32.totalorder %v927, 0
    %v1241 = vand.u32 %v927, 2139095040
    %v1242 = vshrl.u32 %v1241, 23
    %v1243 = vsub.s32 %v1242, 127
    %v1244 = vand.u32 2147483647, %v927
    %v1245 = vand.u32 %v1244, 8388607
    %v1246 = vor.u32 %v1245, 8388608
    %v1247 = vsub.s32 0, %v1246
    %v1248 = vadd.s32 %v1243, 1
    %vm1249 = vcmp.gt.s32.totalorder %v1248, 0
    %v1250 = vsel %vm1249, %v1248, 0
    %v1251 = vshrl.u32 %v1250, 5
    %v1252 = vand.u32 %v1250, 31
    %v1253 = vsub.s32 32, %v1252
    %v1254 = vshrl.u32 683565275, %v1253
    %v1255 = vshll.u32 683565275, %v1252
    %v1256 = vshrl.u32 2475754826, %v1253
    %v1257 = vor.u32 %v1255, %v1256
    %v1258 = vshll.u32 2475754826, %v1252
    %v1259 = vshrl.u32 2131351028, %v1253
    %v1260 = vor.u32 %v1258, %v1259
    %v1261 = vshll.u32 2131351028, %v1252
    %v1262 = vshrl.u32 2102212464, %v1253
    %v1263 = vor.u32 %v1261, %v1262
    %v1264 = vshll.u32 2102212464, %v1252
    %v1265 = vshrl.u32 920167782, %v1253
    %v1266 = vor.u32 %v1264, %v1265
    %v1267 = vshll.u32 920167782, %v1252
    %v1268 = vshrl.u32 1326507024, %v1253
    %v1269 = vor.u32 %v1267, %v1268
    %vm1270 = vcmp.lt.s32.totalorder %v1251, 1
    %vm1271 = vcmp.lt.s32.totalorder %v1251, 2
    %vm1272 = vcmp.lt.s32.totalorder %v1251, 3
    %vm1273 = vcmp.lt.s32.totalorder %v1251, 4
    %v1274 = vsel %vm1270, %v1254, %v1257
    %v1275 = vsel %vm1273, %v1263, 2102212464
    %v1276 = vsel %vm1272, %v1260, %v1275
    %v1277 = vsel %vm1271, %v1274, %v1276
    %v1278 = vsel %vm1270, %v1257, %v1260
    %v1279 = vsel %vm1273, %v1266, 920167782
    %v1280 = vsel %vm1272, %v1263, %v1279
    %v1281 = vsel %vm1271, %v1278, %v1280
    %v1282 = vsel %vm1270, %v1260, %v1263
    %v1283 = vsel %vm1273, %v1269, 1326507024
    %v1284 = vsel %vm1272, %v1266, %v1283
    %v1285 = vsel %vm1271, %v1282, %v1284
    %v1286 = vshll.u32 %v1246, 8
    %v1287 = vmul.u32.u64.compose %v1286, %v1285
    %v1288 = vextract.low.u32 %v1287
    %v1289 = vextract.high.u32 %v1287
    %v1290 = vmul.u32.u64.compose %v1286, %v1281
    %v1291 = vextract.low.u32 %v1290
    %v1292 = vextract.high.u32 %v1290
    %v1293 = vmul.u32 %v1286, %v1277
    %v1294 = vadd.s32 %v1289, %v1291
    %vm1295 = vc.u32 %v1289, %v1291
    %v1296 = vadd.s32 %v1292, 1
    %v1297 = vsel %vm1295, %v1296, %v1292
    %v1298 = vadd.s32 %v1293, %v1297
    %v1299 = vadd.s32 %v1298, 536870912
    %v1300 = vshrl.u32 %v1299, 30
    %v1301 = vshll.u32 %v1300, 30
    %v1302 = vsub.s32 %v1298, %v1301
    %vm1303 = vcmp.lt.s32.totalorder %v1302, 0
    %v1304 = vsub.s32 0, %v1302
    %v1305 = vsel %vm1303, %v1304, %v1302
    %v1306 = vclz %v1305
    %v1307 = vsub.s32 %v1306, 2
    %vm1308 = vcmp.gt.s32.totalorder 0, %v1307
    %v1309 = vsel %vm1308, 0, %v1307
    %v1310 = vsub.s32 32, %v1309
    %v1311 = vshll.u32 %v1302, %v1309
    %v1312 = vshrl.u32 %v1294, %v1310
    %v1313 = vor.u32 %v1311, %v1312
    %v1314 = vsub.s32 4294967266, %v1309
    %v1315 = vadd.s32 %v1314, 127
    %v1316 = vshll.u32 %v1315, 23
    %v1317 = vor.u32 4788187, %v1316
    %v1318 = vand.u32 2147483647, %v1317
    %v1320 = vcvt.s32.f32 %v1313
    %v1321 = vmul.f32 %v1320, %v1318
    %v1322 = vxor.u32 %v1321, 2147483648
    %v1323 = vsel %vm1240, %v1322, %v1321
    %v1324 = vsub.s32 4, %v1300
    %v1325 = vsel %vm1240, %v1324, %v1300
    %v1326 = vsel %vm1239, %v927, %v1323
    %v1327 = vsel %vm1239, 0, %v1325
    %v1328 = vcosq.f32.pop %v1326
    %v1329 = vsinq.f32.pop %v1326
    %vm1330 = vweird.f32 %v927
    %v1331 = vand.u32 %v1327, 3
    %vm1332 = vcmp.lt.s32.totalorder %v1331, 2
    %vm1333 = vcmp.eq.s32.totalorder %v1331, 0
    %v1334 = vxor.u32 %v1329, 2147483648
    %v1335 = vsel %vm1333, %v1328, %v1334
    %vm1336 = vcmp.eq.s32.totalorder %v1331, 2
    %v1337 = vxor.u32 %v1328, 2147483648
    %v1338 = vsel %vm1336, %v1337, %v1329
    %v1339 = vsel %vm1332, %v1335, %v1338
    %v1340 = vsel %vm1330, nan, %v1339
    %1341 = vxpose.xlu0.b32.start [1/16] %v1031, 128
    %1342 = vxpose.xlu0.b32.cont [2/16] 0.0, 128
    %1343 = vxpose.xlu0.b32.cont [3/16] 0.0, 128
    %1344 = vxpose.xlu0.b32.cont [4/16] 0.0, 128
    %1345 = vxpose.xlu0.b32.cont [5/16] 0.0, 128
    %1346 = vxpose.xlu0.b32.cont [6/16] 0.0, 128
    %1347 = vxpose.xlu0.b32.cont [7/16] 0.0, 128
    %1348 = vxpose.xlu0.b32.cont [8/16] 0.0, 128
    %1349 = vxpose.xlu0.b32.cont [9/16] 0.0, 128
    %1350 = vxpose.xlu0.b32.cont [10/16] 0.0, 128
    %1351 = vxpose.xlu0.b32.cont [11/16] 0.0, 128
    %1352 = vxpose.xlu0.b32.cont [12/16] 0.0, 128
    %1353 = vxpose.xlu0.b32.cont [13/16] 0.0, 128
    %1354 = vxpose.xlu0.b32.cont [14/16] 0.0, 128
    %1355 = vxpose.xlu0.b32.cont [15/16] 0.0, 128
    %1356 = vxpose.xlu0.b32.end [16/16] 0.0, 128
    %v1357 = vpop.trf.xlu0
    %v1358 = vpop.trf.xlu0
    %v1359 = vpop.trf.xlu0
    %v1360 = vpop.trf.xlu0
    %v1361 = vpop.trf.xlu0
    %v1362 = vpop.trf.xlu0
    %v1363 = vpop.trf.xlu0
    %v1364 = vpop.trf.xlu0
    %v1365 = vpop.trf.xlu0
    %v1366 = vpop.trf.xlu0
    %v1367 = vpop.trf.xlu0
    %v1368 = vpop.trf.xlu0
    %v1369 = vpop.trf.xlu0
    %v1370 = vpop.trf.xlu0
    %v1371 = vpop.trf.xlu0
    %v1372 = vpop.trf.xlu0
    %1373 = vxpose.xlu0.b32.start [1/16] %v1134, 128
    %1374 = vxpose.xlu0.b32.cont [2/16] 0.0, 128
    %1375 = vxpose.xlu0.b32.cont [3/16] 0.0, 128
    %1376 = vxpose.xlu0.b32.cont [4/16] 0.0, 128
    %1377 = vxpose.xlu0.b32.cont [5/16] 0.0, 128
    %1378 = vxpose.xlu0.b32.cont [6/16] 0.0, 128
    %1379 = vxpose.xlu0.b32.cont [7/16] 0.0, 128
    %1380 = vxpose.xlu0.b32.cont [8/16] 0.0, 128
    %1381 = vxpose.xlu0.b32.cont [9/16] 0.0, 128
    %1382 = vxpose.xlu0.b32.cont [10/16] 0.0, 128
    %1383 = vxpose.xlu0.b32.cont [11/16] 0.0, 128
    %1384 = vxpose.xlu0.b32.cont [12/16] 0.0, 128
    %1385 = vxpose.xlu0.b32.cont [13/16] 0.0, 128
    %1386 = vxpose.xlu0.b32.cont [14/16] 0.0, 128
    %1387 = vxpose.xlu0.b32.cont [15/16] 0.0, 128
    %1388 = vxpose.xlu0.b32.end [16/16] 0.0, 128
    %v1389 = vpop.trf.xlu0
    %v1390 = vpop.trf.xlu0
    %v1391 = vpop.trf.xlu0
    %v1392 = vpop.trf.xlu0
    %v1393 = vpop.trf.xlu0
    %v1394 = vpop.trf.xlu0
    %v1395 = vpop.trf.xlu0
    %v1396 = vpop.trf.xlu0
    %v1397 = vpop.trf.xlu0
    %v1398 = vpop.trf.xlu0
    %v1399 = vpop.trf.xlu0
    %v1400 = vpop.trf.xlu0
    %v1401 = vpop.trf.xlu0
    %v1402 = vpop.trf.xlu0
    %v1403 = vpop.trf.xlu0
    %v1404 = vpop.trf.xlu0
    %vm1405 = vcmask 64512
    %v1407 = vsel %vm1405, %v1357, 0
    %v1410 = vsel %vm1405, %v1358, 0
    %v1413 = vsel %vm1405, %v1359, 0
    %v1416 = vsel %vm1405, %v1360, 0
    %v1419 = vsel %vm1405, %v1361, 0
    %v1422 = vsel %vm1405, %v1362, 0
    %v1425 = vsel %vm1405, %v1363, 0
    %v1428 = vsel %vm1405, %v1364, 0
    %v1431 = vsel %vm1405, %v1365, 0
    %v1434 = vsel %vm1405, %v1366, 0
    %v1437 = vsel %vm1405, %v1367, 0
    %v1440 = vsel %vm1405, %v1368, 0
    %v1443 = vsel %vm1405, %v1369, 0
    %v1446 = vsel %vm1405, %v1370, 0
    %v1449 = vsel %vm1405, %v1371, 0
    %v1452 = vsel %vm1405, %v1372, 0
    %v1455 = vsel %vm1405, %v1389, 0
    %v1458 = vsel %vm1405, %v1390, 0
    %v1461 = vsel %vm1405, %v1391, 0
    %v1464 = vsel %vm1405, %v1392, 0
    %v1467 = vsel %vm1405, %v1393, 0
    %v1470 = vsel %vm1405, %v1394, 0
    %v1473 = vsel %vm1405, %v1395, 0
    %v1476 = vsel %vm1405, %v1396, 0
    %v1479 = vsel %vm1405, %v1397, 0
    %v1482 = vsel %vm1405, %v1398, 0
    %v1485 = vsel %vm1405, %v1399, 0
    %v1488 = vsel %vm1405, %v1400, 0
    %v1491 = vsel %vm1405, %v1401, 0
    %v1494 = vsel %vm1405, %v1402, 0
    %v1497 = vsel %vm1405, %v1403, 0
    %v1500 = vsel %vm1405, %v1404, 0
    %1502 = vmatprep.subr.mxu0 0.0
    %1503 = vmatpush1.msra.mxu0 %v323
    %1504 = vmatprep.subr.mxu0 0.0
    %1505 = vmatpush1.msra.mxu0 0.0
    %1506 = vmatprep.subr.mxu0 0.0
    %1507 = vmatpush1.msra.mxu0 0.0
    %1508 = vmatprep.subr.mxu0 0.0
    %1509 = vmatpush1.msra.mxu0 0.0
    %1510 = vmatprep.subr.mxu0 0.0
    %1511 = vmatpush1.msra.mxu0 0.0
    %1512 = vmatprep.subr.mxu0 0.0
    %1513 = vmatpush1.msra.mxu0 0.0
    %1514 = vmatprep.subr.mxu0 0.0
    %1515 = vmatpush1.msra.mxu0 0.0
    %1516 = vmatprep.subr.mxu0 0.0
    %1517 = vmatpush1.msra.mxu0 0.0
    %1518 = vmatprep.subr.mxu0 0.0
    %1519 = vmatpush1.msra.mxu0 0.0
    %1520 = vmatprep.subr.mxu0 0.0
    %1521 = vmatpush1.msra.mxu0 0.0
    %1522 = vmatprep.subr.mxu0 0.0
    %1523 = vmatpush1.msra.mxu0 0.0
    %1524 = vmatprep.subr.mxu0 0.0
    %1525 = vmatpush1.msra.mxu0 0.0
    %1526 = vmatprep.subr.mxu0 0.0
    %1527 = vmatpush1.msra.mxu0 0.0
    %1528 = vmatprep.subr.mxu0 0.0
    %1529 = vmatpush1.msra.mxu0 0.0
    %1530 = vmatprep.subr.mxu0 0.0
    %1531 = vmatpush1.msra.mxu0 0.0
    %1532 = vmatprep.subr.mxu0 0.0
    %1533 = vmatpush1.msra.mxu0 0.0
    %1534 = vmatprep.subr.mxu0 0.0
    %1535 = vmatpush1.msra.mxu0 0.0
    %1536 = vmatprep.subr.mxu0 0.0
    %1537 = vmatpush1.msra.mxu0 0.0
    %1538 = vmatprep.subr.mxu0 0.0
    %1539 = vmatpush1.msra.mxu0 0.0
    %1540 = vmatprep.subr.mxu0 0.0
    %1541 = vmatpush1.msra.mxu0 0.0
    %1542 = vmatprep.subr.mxu0 0.0
    %1543 = vmatpush1.msra.mxu0 0.0
    %1544 = vmatprep.subr.mxu0 0.0
    %1545 = vmatpush1.msra.mxu0 0.0
    %1546 = vmatprep.subr.mxu0 0.0
    %1547 = vmatpush1.msra.mxu0 0.0
    %1548 = vmatprep.subr.mxu0 0.0
    %1549 = vmatpush1.msra.mxu0 0.0
    %1550 = vmatprep.subr.mxu0 0.0
    %1551 = vmatpush1.msra.mxu0 0.0
    %1552 = vmatprep.subr.mxu0 0.0
    %1553 = vmatpush1.msra.mxu0 0.0
    %1554 = vmatprep.subr.mxu0 0.0
    %1555 = vmatpush1.msra.mxu0 0.0
    %1556 = vmatprep.subr.mxu0 0.0
    %1557 = vmatpush1.msra.mxu0 0.0
    %1558 = vmatprep.subr.mxu0 0.0
    %1559 = vmatpush1.msra.mxu0 0.0
    %1560 = vmatprep.subr.mxu0 0.0
    %1561 = vmatpush1.msra.mxu0 0.0
    %1562 = vmatprep.subr.mxu0 0.0
    %1563 = vmatpush1.msra.mxu0 0.0
    %1564 = vmatprep.subr.mxu0 0.0
    %1565 = vmatpush1.msra.mxu0 0.0
    %1566 = vmatprep.mubr.f32.mxu0 0.0
    %1567 = vmatmul.mubr.f32.gmra.mrb[0].mxu0 %v1407
    %v1568 = vpop.f32.mrb[0].mxu0
    %v1569 = vadd.f32 0.0, %v1568
    %v1570 = vpop.f32.mrb[0].mxu0
    %1571 = vmatprep.mubr.f32.mxu0 0.0
    %1572 = vmatmul.mubr.f32.gmra.mrb[0].mxu0 %v1410
    %v1573 = vpop.f32.mrb[0].mxu0
    %v1574 = vadd.f32 0.0, %v1573
    %v1575 = vpop.f32.mrb[0].mxu0
    %1576 = vmatprep.mubr.f32.mxu0 0.0
    %1577 = vmatmul.mubr.f32.gmra.mrb[0].mxu0 %v1413
    %v1578 = vpop.f32.mrb[0].mxu0
    %v1579 = vadd.f32 0.0, %v1578
    %v1580 = vpop.f32.mrb[0].mxu0
    %1581 = vmatprep.mubr.f32.mxu0 0.0
    %1582 = vmatmul.mubr.f32.gmra.mrb[0].mxu0 %v1416
    %v1583 = vpop.f32.mrb[0].mxu0
    %v1584 = vadd.f32 0.0, %v1583
    %v1585 = vpop.f32.mrb[0].mxu0
    %1586 = vmatprep.mubr.f32.mxu0 0.0
    %1587 = vmatmul.mubr.f32.gmra.mrb[0].mxu0 %v1419
    %v1588 = vpop.f32.mrb[0].mxu0
    %v1589 = vadd.f32 0.0, %v1588
    %v1590 = vpop.f32.mrb[0].mxu0
    %1591 = vmatprep.mubr.f32.mxu0 0.0
    %1592 = vmatmul.mubr.f32.gmra.mrb[0].mxu0 %v1422
    %v1593 = vpop.f32.mrb[0].mxu0
    %v1594 = vadd.f32 0.0, %v1593
    %v1595 = vpop.f32.mrb[0].mxu0
    %1596 = vmatprep.mubr.f32.mxu0 0.0
    %1597 = vmatmul.mubr.f32.gmra.mrb[0].mxu0 %v1425
    %v1598 = vpop.f32.mrb[0].mxu0
    %v1599 = vadd.f32 0.0, %v1598
    %v1600 = vpop.f32.mrb[0].mxu0
    %1601 = vmatprep.mubr.f32.mxu0 0.0
    %1602 = vmatmul.mubr.f32.gmra.mrb[0].mxu0 %v1428
    %v1603 = vpop.f32.mrb[0].mxu0
    %v1604 = vadd.f32 0.0, %v1603
    %v1605 = vpop.f32.mrb[0].mxu0
    %1606 = vmatprep.mubr.f32.mxu0 0.0
    %1607 = vmatmul.mubr.f32.gmra.mrb[0].mxu0 %v1431
    %v1608 = vpop.f32.mrb[0].mxu0
    %v1609 = vadd.f32 0.0, %v1608
    %v1610 = vpop.f32.mrb[0].mxu0
    %1611 = vmatprep.mubr.f32.mxu0 0.0
    %1612 = vmatmul.mubr.f32.gmra.mrb[0].mxu0 %v1434
    %v1613 = vpop.f32.mrb[0].mxu0
    %v1614 = vadd.f32 0.0, %v1613
    %v1615 = vpop.f32.mrb[0].mxu0
    %1616 = vmatprep.mubr.f32.mxu0 0.0
    %1617 = vmatmul.mubr.f32.gmra.mrb[0].mxu0 %v1437
    %v1618 = vpop.f32.mrb[0].mxu0
    %v1619 = vadd.f32 0.0, %v1618
    %v1620 = vpop.f32.mrb[0].mxu0
    %1621 = vmatprep.mubr.f32.mxu0 0.0
    %1622 = vmatmul.mubr.f32.gmra.mrb[0].mxu0 %v1440
    %v1623 = vpop.f32.mrb[0].mxu0
    %v1624 = vadd.f32 0.0, %v1623
    %v1625 = vpop.f32.mrb[0].mxu0
    %1626 = vmatprep.mubr.f32.mxu0 0.0
    %1627 = vmatmul.mubr.f32.gmra.mrb[0].mxu0 %v1443
    %v1628 = vpop.f32.mrb[0].mxu0
    %v1629 = vadd.f32 0.0, %v1628
    %v1630 = vpop.f32.mrb[0].mxu0
    %1631 = vmatprep.mubr.f32.mxu0 0.0
    %1632 = vmatmul.mubr.f32.gmra.mrb[0].mxu0 %v1446
    %v1633 = vpop.f32.mrb[0].mxu0
    %v1634 = vadd.f32 0.0, %v1633
    %v1635 = vpop.f32.mrb[0].mxu0
    %1636 = vmatprep.mubr.f32.mxu0 0.0
    %1637 = vmatmul.mubr.f32.gmra.mrb[0].mxu0 %v1449
    %v1638 = vpop.f32.mrb[0].mxu0
    %v1639 = vadd.f32 0.0, %v1638
    %v1640 = vpop.f32.mrb[0].mxu0
    %1641 = vmatprep.mubr.f32.mxu0 0.0
    %1642 = vmatmul.mubr.f32.gmra.mrb[0].mxu0 %v1452
    %v1643 = vpop.f32.mrb[0].mxu0
    %v1644 = vadd.f32 0.0, %v1643
    %v1645 = vpop.f32.mrb[0].mxu0
    %1646 = vmatprep.mubr.f32.mxu0 0.0
    %1647 = vmatmul.mubr.f32.gmra.mrb[0].mxu0 %v1455
    %v1648 = vpop.f32.mrb[0].mxu0
    %v1649 = vadd.f32 0.0, %v1648
    %v1650 = vpop.f32.mrb[0].mxu0
    %1651 = vmatprep.mubr.f32.mxu0 0.0
    %1652 = vmatmul.mubr.f32.gmra.mrb[0].mxu0 %v1458
    %v1653 = vpop.f32.mrb[0].mxu0
    %v1654 = vadd.f32 0.0, %v1653
    %v1655 = vpop.f32.mrb[0].mxu0
    %1656 = vmatprep.mubr.f32.mxu0 0.0
    %1657 = vmatmul.mubr.f32.gmra.mrb[0].mxu0 %v1461
    %v1658 = vpop.f32.mrb[0].mxu0
    %v1659 = vadd.f32 0.0, %v1658
    %v1660 = vpop.f32.mrb[0].mxu0
    %1661 = vmatprep.mubr.f32.mxu0 0.0
    %1662 = vmatmul.mubr.f32.gmra.mrb[0].mxu0 %v1464
    %v1663 = vpop.f32.mrb[0].mxu0
    %v1664 = vadd.f32 0.0, %v1663
    %v1665 = vpop.f32.mrb[0].mxu0
    %1666 = vmatprep.mubr.f32.mxu0 0.0
    %1667 = vmatmul.mubr.f32.gmra.mrb[0].mxu0 %v1467
    %v1668 = vpop.f32.mrb[0].mxu0
    %v1669 = vadd.f32 0.0, %v1668
    %v1670 = vpop.f32.mrb[0].mxu0
    %1671 = vmatprep.mubr.f32.mxu0 0.0
    %1672 = vmatmul.mubr.f32.gmra.mrb[0].mxu0 %v1470
    %v1673 = vpop.f32.mrb[0].mxu0
    %v1674 = vadd.f32 0.0, %v1673
    %v1675 = vpop.f32.mrb[0].mxu0
    %1676 = vmatprep.mubr.f32.mxu0 0.0
    %1677 = vmatmul.mubr.f32.gmra.mrb[0].mxu0 %v1473
    %v1678 = vpop.f32.mrb[0].mxu0
    %v1679 = vadd.f32 0.0, %v1678
    %v1680 = vpop.f32.mrb[0].mxu0
    %1681 = vmatprep.mubr.f32.mxu0 0.0
    %1682 = vmatmul.mubr.f32.gmra.mrb[0].mxu0 %v1476
    %v1683 = vpop.f32.mrb[0].mxu0
    %v1684 = vadd.f32 0.0, %v1683
    %v1685 = vpop.f32.mrb[0].mxu0
    %1686 = vmatprep.mubr.f32.mxu0 0.0
    %1687 = vmatmul.mubr.f32.gmra.mrb[0].mxu0 %v1479
    %v1688 = vpop.f32.mrb[0].mxu0
    %v1689 = vadd.f32 0.0, %v1688
    %v1690 = vpop.f32.mrb[0].mxu0
    %1691 = vmatprep.mubr.f32.mxu0 0.0
    %1692 = vmatmul.mubr.f32.gmra.mrb[0].mxu0 %v1482
    %v1693 = vpop.f32.mrb[0].mxu0
    %v1694 = vadd.f32 0.0, %v1693
    %v1695 = vpop.f32.mrb[0].mxu0
    %1696 = vmatprep.mubr.f32.mxu0 0.0
    %1697 = vmatmul.mubr.f32.gmra.mrb[0].mxu0 %v1485
    %v1698 = vpop.f32.mrb[0].mxu0
    %v1699 = vadd.f32 0.0, %v1698
    %v1700 = vpop.f32.mrb[0].mxu0
    %1701 = vmatprep.mubr.f32.mxu0 0.0
    %1702 = vmatmul.mubr.f32.gmra.mrb[0].mxu0 %v1488
    %v1703 = vpop.f32.mrb[0].mxu0
    %v1704 = vadd.f32 0.0, %v1703
    %v1705 = vpop.f32.mrb[0].mxu0
    %1706 = vmatprep.mubr.f32.mxu0 0.0
    %1707 = vmatmul.mubr.f32.gmra.mrb[0].mxu0 %v1491
    %v1708 = vpop.f32.mrb[0].mxu0
    %v1709 = vadd.f32 0.0, %v1708
    %v1710 = vpop.f32.mrb[0].mxu0
    %1711 = vmatprep.mubr.f32.mxu0 0.0
    %1712 = vmatmul.mubr.f32.gmra.mrb[0].mxu0 %v1494
    %v1713 = vpop.f32.mrb[0].mxu0
    %v1714 = vadd.f32 0.0, %v1713
    %v1715 = vpop.f32.mrb[0].mxu0
    %1716 = vmatprep.mubr.f32.mxu0 0.0
    %1717 = vmatmul.mubr.f32.gmra.mrb[0].mxu0 %v1497
    %v1718 = vpop.f32.mrb[0].mxu0
    %v1719 = vadd.f32 0.0, %v1718
    %v1720 = vpop.f32.mrb[0].mxu0
    %1721 = vmatprep.mubr.f32.mxu0 0.0
    %1722 = vmatmul.mubr.f32.gmra.mrb[0].mxu0 %v1500
    %v1723 = vpop.f32.mrb[0].mxu0
    %v1724 = vadd.f32 0.0, %v1723
    %v1725 = vpop.f32.mrb[0].mxu0
    %1726 = vdwg.mxu0
    %1727 = vxpose.xlu0.b32.start [1/16] %v1237, 128
    %1728 = vxpose.xlu0.b32.cont [2/16] 0.0, 128
    %1729 = vxpose.xlu0.b32.cont [3/16] 0.0, 128
    %1730 = vxpose.xlu0.b32.cont [4/16] 0.0, 128
    %1731 = vxpose.xlu0.b32.cont [5/16] 0.0, 128
    %1732 = vxpose.xlu0.b32.cont [6/16] 0.0, 128
    %1733 = vxpose.xlu0.b32.cont [7/16] 0.0, 128
    %1734 = vxpose.xlu0.b32.cont [8/16] 0.0, 128
    %1735 = vxpose.xlu0.b32.cont [9/16] 0.0, 128
    %1736 = vxpose.xlu0.b32.cont [10/16] 0.0, 128
    %1737 = vxpose.xlu0.b32.cont [11/16] 0.0, 128
    %1738 = vxpose.xlu0.b32.cont [12/16] 0.0, 128
    %1739 = vxpose.xlu0.b32.cont [13/16] 0.0, 128
    %1740 = vxpose.xlu0.b32.cont [14/16] 0.0, 128
    %1741 = vxpose.xlu0.b32.cont [15/16] 0.0, 128
    %1742 = vxpose.xlu0.b32.end [16/16] 0.0, 128
    %v1743 = vpop.trf.xlu0
    %v1744 = vpop.trf.xlu0
    %v1745 = vpop.trf.xlu0
    %v1746 = vpop.trf.xlu0
    %v1747 = vpop.trf.xlu0
    %v1748 = vpop.trf.xlu0
    %v1749 = vpop.trf.xlu0
    %v1750 = vpop.trf.xlu0
    %v1751 = vpop.trf.xlu0
    %v1752 = vpop.trf.xlu0
    %v1753 = vpop.trf.xlu0
    %v1754 = vpop.trf.xlu0
    %v1755 = vpop.trf.xlu0
    %v1756 = vpop.trf.xlu0
    %v1757 = vpop.trf.xlu0
    %v1758 = vpop.trf.xlu0
    %1759 = vxpose.xlu0.b32.start [1/16] %v1340, 128
    %1760 = vxpose.xlu0.b32.cont [2/16] 0.0, 128
    %1761 = vxpose.xlu0.b32.cont [3/16] 0.0, 128
    %1762 = vxpose.xlu0.b32.cont [4/16] 0.0, 128
    %1763 = vxpose.xlu0.b32.cont [5/16] 0.0, 128
    %1764 = vxpose.xlu0.b32.cont [6/16] 0.0, 128
    %1765 = vxpose.xlu0.b32.cont [7/16] 0.0, 128
    %1766 = vxpose.xlu0.b32.cont [8/16] 0.0, 128
    %1767 = vxpose.xlu0.b32.cont [9/16] 0.0, 128
    %1768 = vxpose.xlu0.b32.cont [10/16] 0.0, 128
    %1769 = vxpose.xlu0.b32.cont [11/16] 0.0, 128
    %1770 = vxpose.xlu0.b32.cont [12/16] 0.0, 128
    %1771 = vxpose.xlu0.b32.cont [13/16] 0.0, 128
    %1772 = vxpose.xlu0.b32.cont [14/16] 0.0, 128
    %1773 = vxpose.xlu0.b32.cont [15/16] 0.0, 128
    %1774 = vxpose.xlu0.b32.end [16/16] 0.0, 128
    %v1775 = vpop.trf.xlu0
    %v1776 = vpop.trf.xlu0
    %v1777 = vpop.trf.xlu0
    %v1778 = vpop.trf.xlu0
    %v1779 = vpop.trf.xlu0
    %v1780 = vpop.trf.xlu0
    %v1781 = vpop.trf.xlu0
    %v1782 = vpop.trf.xlu0
    %v1783 = vpop.trf.xlu0
    %v1784 = vpop.trf.xlu0
    %v1785 = vpop.trf.xlu0
    %v1786 = vpop.trf.xlu0
    %v1787 = vpop.trf.xlu0
    %v1788 = vpop.trf.xlu0
    %v1789 = vpop.trf.xlu0
    %v1790 = vpop.trf.xlu0
    %v1792 = vsel %vm1405, %v1743, 0
    %v1795 = vsel %vm1405, %v1744, 0
    %v1798 = vsel %vm1405, %v1745, 0
    %v1801 = vsel %vm1405, %v1746, 0
    %v1804 = vsel %vm1405, %v1747, 0
    %v1807 = vsel %vm1405, %v1748, 0
    %v1810 = vsel %vm1405, %v1749, 0
    %v1813 = vsel %vm1405, %v1750, 0
    %v1816 = vsel %vm1405, %v1751, 0
    %v1819 = vsel %vm1405, %v1752, 0
    %v1822 = vsel %vm1405, %v1753, 0
    %v1825 = vsel %vm1405, %v1754, 0
    %v1828 = vsel %vm1405, %v1755, 0
    %v1831 = vsel %vm1405, %v1756, 0
    %v1834 = vsel %vm1405, %v1757, 0
    %v1837 = vsel %vm1405, %v1758, 0
    %v1840 = vsel %vm1405, %v1775, 0
    %v1843 = vsel %vm1405, %v1776, 0
    %v1846 = vsel %vm1405, %v1777, 0
    %v1849 = vsel %vm1405, %v1778, 0
    %v1852 = vsel %vm1405, %v1779, 0
    %v1855 = vsel %vm1405, %v1780, 0
    %v1858 = vsel %vm1405, %v1781, 0
    %v1861 = vsel %vm1405, %v1782, 0
    %v1864 = vsel %vm1405, %v1783, 0
    %v1867 = vsel %vm1405, %v1784, 0
    %v1870 = vsel %vm1405, %v1785, 0
    %v1873 = vsel %vm1405, %v1786, 0
    %v1876 = vsel %vm1405, %v1787, 0
    %v1879 = vsel %vm1405, %v1788, 0
    %v1882 = vsel %vm1405, %v1789, 0
    %v1885 = vsel %vm1405, %v1790, 0
    %1887 = vmatprep.subr.mxu0 0.0
    %1888 = vmatpush1.msra.mxu0 %v328
    %1889 = vmatprep.subr.mxu0 0.0
    %1890 = vmatpush1.msra.mxu0 0.0
    %1891 = vmatprep.subr.mxu0 0.0
    %1892 = vmatpush1.msra.mxu0 0.0
    %1893 = vmatprep.subr.mxu0 0.0
    %1894 = vmatpush1.msra.mxu0 0.0
    %1895 = vmatprep.subr.mxu0 0.0
    %1896 = vmatpush1.msra.mxu0 0.0
    %1897 = vmatprep.subr.mxu0 0.0
    %1898 = vmatpush1.msra.mxu0 0.0
    %1899 = vmatprep.subr.mxu0 0.0
    %1900 = vmatpush1.msra.mxu0 0.0
    %1901 = vmatprep.subr.mxu0 0.0
    %1902 = vmatpush1.msra.mxu0 0.0
    %1903 = vmatprep.subr.mxu0 0.0
    %1904 = vmatpush1.msra.mxu0 0.0
    %1905 = vmatprep.subr.mxu0 0.0
    %1906 = vmatpush1.msra.mxu0 0.0
    %1907 = vmatprep.subr.mxu0 0.0
    %1908 = vmatpush1.msra.mxu0 0.0
    %1909 = vmatprep.subr.mxu0 0.0
    %1910 = vmatpush1.msra.mxu0 0.0
    %1911 = vmatprep.subr.mxu0 0.0
    %1912 = vmatpush1.msra.mxu0 0.0
    %1913 = vmatprep.subr.mxu0 0.0
    %1914 = vmatpush1.msra.mxu0 0.0
    %1915 = vmatprep.subr.mxu0 0.0
    %1916 = vmatpush1.msra.mxu0 0.0
    %1917 = vmatprep.subr.mxu0 0.0
    %1918 = vmatpush1.msra.mxu0 0.0
    %1919 = vmatprep.subr.mxu0 0.0
    %1920 = vmatpush1.msra.mxu0 0.0
    %1921 = vmatprep.subr.mxu0 0.0
    %1922 = vmatpush1.msra.mxu0 0.0
    %1923 = vmatprep.subr.mxu0 0.0
    %1924 = vmatpush1.msra.mxu0 0.0
    %1925 = vmatprep.subr.mxu0 0.0
    %1926 = vmatpush1.msra.mxu0 0.0
    %1927 = vmatprep.subr.mxu0 0.0
    %1928 = vmatpush1.msra.mxu0 0.0
    %1929 = vmatprep.subr.mxu0 0.0
    %1930 = vmatpush1.msra.mxu0 0.0
    %1931 = vmatprep.subr.mxu0 0.0
    %1932 = vmatpush1.msra.mxu0 0.0
    %1933 = vmatprep.subr.mxu0 0.0
    %1934 = vmatpush1.msra.mxu0 0.0
    %1935 = vmatprep.subr.mxu0 0.0
    %1936 = vmatpush1.msra.mxu0 0.0
    %1937 = vmatprep.subr.mxu0 0.0
    %1938 = vmatpush1.msra.mxu0 0.0
    %1939 = vmatprep.subr.mxu0 0.0
    %1940 = vmatpush1.msra.mxu0 0.0
    %1941 = vmatprep.subr.mxu0 0.0
    %1942 = vmatpush1.msra.mxu0 0.0
    %1943 = vmatprep.subr.mxu0 0.0
    %1944 = vmatpush1.msra.mxu0 0.0
    %1945 = vmatprep.subr.mxu0 0.0
    %1946 = vmatpush1.msra.mxu0 0.0
    %1947 = vmatprep.subr.mxu0 0.0
    %1948 = vmatpush1.msra.mxu0 0.0
    %1949 = vmatprep.subr.mxu0 0.0
    %1950 = vmatpush1.msra.mxu0 0.0
    %1951 = vmatprep.mubr.f32.mxu0 0.0
    %1952 = vmatmul.mubr.f32.gmra.mrb[0].mxu0 %v1792
    %v1953 = vpop.f32.mrb[0].mxu0
    %v1954 = vadd.f32 0.0, %v1953
    %v1955 = vpop.f32.mrb[0].mxu0
    %1956 = vmatprep.mubr.f32.mxu0 0.0
    %1957 = vmatmul.mubr.f32.gmra.mrb[0].mxu0 %v1795
    %v1958 = vpop.f32.mrb[0].mxu0
    %v1959 = vadd.f32 0.0, %v1958
    %v1960 = vpop.f32.mrb[0].mxu0
    %1961 = vmatprep.mubr.f32.mxu0 0.0
    %1962 = vmatmul.mubr.f32.gmra.mrb[0].mxu0 %v1798
    %v1963 = vpop.f32.mrb[0].mxu0
    %v1964 = vadd.f32 0.0, %v1963
    %v1965 = vpop.f32.mrb[0].mxu0
    %1966 = vmatprep.mubr.f32.mxu0 0.0
    %1967 = vmatmul.mubr.f32.gmra.mrb[0].mxu0 %v1801
    %v1968 = vpop.f32.mrb[0].mxu0
    %v1969 = vadd.f32 0.0, %v1968
    %v1970 = vpop.f32.mrb[0].mxu0
    %1971 = vmatprep.mubr.f32.mxu0 0.0
    %1972 = vmatmul.mubr.f32.gmra.mrb[0].mxu0 %v1804
    %v1973 = vpop.f32.mrb[0].mxu0
    %v1974 = vadd.f32 0.0, %v1973
    %v1975 = vpop.f32.mrb[0].mxu0
    %1976 = vmatprep.mubr.f32.mxu0 0.0
    %1977 = vmatmul.mubr.f32.gmra.mrb[0].mxu0 %v1807
    %v1978 = vpop.f32.mrb[0].mxu0
    %v1979 = vadd.f32 0.0, %v1978
    %v1980 = vpop.f32.mrb[0].mxu0
    %1981 = vmatprep.mubr.f32.mxu0 0.0
    %1982 = vmatmul.mubr.f32.gmra.mrb[0].mxu0 %v1810
    %v1983 = vpop.f32.mrb[0].mxu0
    %v1984 = vadd.f32 0.0, %v1983
    %v1985 = vpop.f32.mrb[0].mxu0
    %1986 = vmatprep.mubr.f32.mxu0 0.0
    %1987 = vmatmul.mubr.f32.gmra.mrb[0].mxu0 %v1813
    %v1988 = vpop.f32.mrb[0].mxu0
    %v1989 = vadd.f32 0.0, %v1988
    %v1990 = vpop.f32.mrb[0].mxu0
    %1991 = vmatprep.mubr.f32.mxu0 0.0
    %1992 = vmatmul.mubr.f32.gmra.mrb[0].mxu0 %v1816
    %v1993 = vpop.f32.mrb[0].mxu0
    %v1994 = vadd.f32 0.0, %v1993
    %v1995 = vpop.f32.mrb[0].mxu0
    %1996 = vmatprep.mubr.f32.mxu0 0.0
    %1997 = vmatmul.mubr.f32.gmra.mrb[0].mxu0 %v1819
    %v1998 = vpop.f32.mrb[0].mxu0
    %v1999 = vadd.f32 0.0, %v1998
    %v2000 = vpop.f32.mrb[0].mxu0
    %2001 = vmatprep.mubr.f32.mxu0 0.0
    %2002 = vmatmul.mubr.f32.gmra.mrb[0].mxu0 %v1822
    %v2003 = vpop.f32.mrb[0].mxu0
    %v2004 = vadd.f32 0.0, %v2003
    %v2005 = vpop.f32.mrb[0].mxu0
    %2006 = vmatprep.mubr.f32.mxu0 0.0
    %2007 = vmatmul.mubr.f32.gmra.mrb[0].mxu0 %v1825
    %v2008 = vpop.f32.mrb[0].mxu0
    %v2009 = vadd.f32 0.0, %v2008
    %v2010 = vpop.f32.mrb[0].mxu0
    %2011 = vmatprep.mubr.f32.mxu0 0.0
    %2012 = vmatmul.mubr.f32.gmra.mrb[0].mxu0 %v1828
    %v2013 = vpop.f32.mrb[0].mxu0
    %v2014 = vadd.f32 0.0, %v2013
    %v2015 = vpop.f32.mrb[0].mxu0
    %2016 = vmatprep.mubr.f32.mxu0 0.0
    %2017 = vmatmul.mubr.f32.gmra.mrb[0].mxu0 %v1831
    %v2018 = vpop.f32.mrb[0].mxu0
    %v2019 = vadd.f32 0.0, %v2018
    %v2020 = vpop.f32.mrb[0].mxu0
    %2021 = vmatprep.mubr.f32.mxu0 0.0
    %2022 = vmatmul.mubr.f32.gmra.mrb[0].mxu0 %v1834
    %v2023 = vpop.f32.mrb[0].mxu0
    %v2024 = vadd.f32 0.0, %v2023
    %v2025 = vpop.f32.mrb[0].mxu0
    %2026 = vmatprep.mubr.f32.mxu0 0.0
    %2027 = vmatmul.mubr.f32.gmra.mrb[0].mxu0 %v1837
    %v2028 = vpop.f32.mrb[0].mxu0
    %v2029 = vadd.f32 0.0, %v2028
    %v2030 = vpop.f32.mrb[0].mxu0
    %2031 = vmatprep.mubr.f32.mxu0 0.0
    %2032 = vmatmul.mubr.f32.gmra.mrb[0].mxu0 %v1840
    %v2033 = vpop.f32.mrb[0].mxu0
    %v2034 = vadd.f32 0.0, %v2033
    %v2035 = vpop.f32.mrb[0].mxu0
    %2036 = vmatprep.mubr.f32.mxu0 0.0
    %2037 = vmatmul.mubr.f32.gmra.mrb[0].mxu0 %v1843
    %v2038 = vpop.f32.mrb[0].mxu0
    %v2039 = vadd.f32 0.0, %v2038
    %v2040 = vpop.f32.mrb[0].mxu0
    %2041 = vmatprep.mubr.f32.mxu0 0.0
    %2042 = vmatmul.mubr.f32.gmra.mrb[0].mxu0 %v1846
    %v2043 = vpop.f32.mrb[0].mxu0
    %v2044 = vadd.f32 0.0, %v2043
    %v2045 = vpop.f32.mrb[0].mxu0
    %2046 = vmatprep.mubr.f32.mxu0 0.0
    %2047 = vmatmul.mubr.f32.gmra.mrb[0].mxu0 %v1849
    %v2048 = vpop.f32.mrb[0].mxu0
    %v2049 = vadd.f32 0.0, %v2048
    %v2050 = vpop.f32.mrb[0].mxu0
    %2051 = vmatprep.mubr.f32.mxu0 0.0
    %2052 = vmatmul.mubr.f32.gmra.mrb[0].mxu0 %v1852
    %v2053 = vpop.f32.mrb[0].mxu0
    %v2054 = vadd.f32 0.0, %v2053
    %v2055 = vpop.f32.mrb[0].mxu0
    %2056 = vmatprep.mubr.f32.mxu0 0.0
    %2057 = vmatmul.mubr.f32.gmra.mrb[0].mxu0 %v1855
    %v2058 = vpop.f32.mrb[0].mxu0
    %v2059 = vadd.f32 0.0, %v2058
    %v2060 = vpop.f32.mrb[0].mxu0
    %2061 = vmatprep.mubr.f32.mxu0 0.0
    %2062 = vmatmul.mubr.f32.gmra.mrb[0].mxu0 %v1858
    %v2063 = vpop.f32.mrb[0].mxu0
    %v2064 = vadd.f32 0.0, %v2063
    %v2065 = vpop.f32.mrb[0].mxu0
    %2066 = vmatprep.mubr.f32.mxu0 0.0
    %2067 = vmatmul.mubr.f32.gmra.mrb[0].mxu0 %v1861
    %v2068 = vpop.f32.mrb[0].mxu0
    %v2069 = vadd.f32 0.0, %v2068
    %v2070 = vpop.f32.mrb[0].mxu0
    %2071 = vmatprep.mubr.f32.mxu0 0.0
    %2072 = vmatmul.mubr.f32.gmra.mrb[0].mxu0 %v1864
    %v2073 = vpop.f32.mrb[0].mxu0
    %v2074 = vadd.f32 0.0, %v2073
    %v2075 = vpop.f32.mrb[0].mxu0
    %2076 = vmatprep.mubr.f32.mxu0 0.0
    %2077 = vmatmul.mubr.f32.gmra.mrb[0].mxu0 %v1867
    %v2078 = vpop.f32.mrb[0].mxu0
    %v2079 = vadd.f32 0.0, %v2078
    %v2080 = vpop.f32.mrb[0].mxu0
    %2081 = vmatprep.mubr.f32.mxu0 0.0
    %2082 = vmatmul.mubr.f32.gmra.mrb[0].mxu0 %v1870
    %v2083 = vpop.f32.mrb[0].mxu0
    %v2084 = vadd.f32 0.0, %v2083
    %v2085 = vpop.f32.mrb[0].mxu0
    %2086 = vmatprep.mubr.f32.mxu0 0.0
    %2087 = vmatmul.mubr.f32.gmra.mrb[0].mxu0 %v1873
    %v2088 = vpop.f32.mrb[0].mxu0
    %v2089 = vadd.f32 0.0, %v2088
    %v2090 = vpop.f32.mrb[0].mxu0
    %2091 = vmatprep.mubr.f32.mxu0 0.0
    %2092 = vmatmul.mubr.f32.gmra.mrb[0].mxu0 %v1876
    %v2093 = vpop.f32.mrb[0].mxu0
    %v2094 = vadd.f32 0.0, %v2093
    %v2095 = vpop.f32.mrb[0].mxu0
    %2096 = vmatprep.mubr.f32.mxu0 0.0
    %2097 = vmatmul.mubr.f32.gmra.mrb[0].mxu0 %v1879
    %v2098 = vpop.f32.mrb[0].mxu0
    %v2099 = vadd.f32 0.0, %v2098
    %v2100 = vpop.f32.mrb[0].mxu0
    %2101 = vmatprep.mubr.f32.mxu0 0.0
    %2102 = vmatmul.mubr.f32.gmra.mrb[0].mxu0 %v1882
    %v2103 = vpop.f32.mrb[0].mxu0
    %v2104 = vadd.f32 0.0, %v2103
    %v2105 = vpop.f32.mrb[0].mxu0
    %2106 = vmatprep.mubr.f32.mxu0 0.0
    %2107 = vmatmul.mubr.f32.gmra.mrb[0].mxu0 %v1885
    %v2108 = vpop.f32.mrb[0].mxu0
    %v2109 = vadd.f32 0.0, %v2108
    %v2110 = vpop.f32.mrb[0].mxu0
    %2111 = vdwg.mxu0
    %v2112 = vld [vmem:[%s11] sm:$0xff]
    %v2113 = vld [vmem:[%s11 + $0x8] sm:$0xff]
    %v2114 = vld [vmem:[%s11 + $0x10] sm:$0xff]
    %v2115 = vld [vmem:[%s11 + $0x18] sm:$0xff]
    %v2116 = vld [vmem:[%s11 + $0x20] sm:$0xff]
    %v2117 = vld [vmem:[%s11 + $0x28] sm:$0xff]
    %v2118 = vld [vmem:[%s11 + $0x30] sm:$0xff]
    %v2119 = vld [vmem:[%s11 + $0x38] sm:$0xff]
    %v2120 = vld [vmem:[%s11 + $0x40] sm:$0xff]
    %v2121 = vld [vmem:[%s11 + $0x48] sm:$0xff]
    %v2122 = vld [vmem:[%s11 + $0x50] sm:$0xff]
    %v2123 = vld [vmem:[%s11 + $0x58] sm:$0xff]
    %v2124 = vld [vmem:[%s11 + $0x60] sm:$0xff]
    %v2125 = vld [vmem:[%s11 + $0x68] sm:$0xff]
    %v2126 = vld [vmem:[%s11 + $0x70] sm:$0xff]
    %v2127 = vld [vmem:[%s11 + $0x78] sm:$0xff]
    %v2128 = vld [vmem:[%s11 + $0x80] sm:$0xff]
    %v2129 = vld [vmem:[%s11 + $0x88] sm:$0xff]
    %v2130 = vld [vmem:[%s11 + $0x90] sm:$0xff]
    %v2131 = vld [vmem:[%s11 + $0x98] sm:$0xff]
    %v2132 = vld [vmem:[%s11 + $0xa0] sm:$0xff]
    %v2133 = vld [vmem:[%s11 + $0xa8] sm:$0xff]
    %v2134 = vld [vmem:[%s11 + $0xb0] sm:$0xff]
    %v2135 = vld [vmem:[%s11 + $0xb8] sm:$0xff]
    %v2136 = vld [vmem:[%s11 + $0xc0] sm:$0xff]
    %v2137 = vld [vmem:[%s11 + $0xc8] sm:$0xff]
    %v2138 = vld [vmem:[%s11 + $0xd0] sm:$0xff]
    %v2139 = vld [vmem:[%s11 + $0xd8] sm:$0xff]
    %v2140 = vld [vmem:[%s11 + $0xe0] sm:$0xff]
    %v2141 = vld [vmem:[%s11 + $0xe8] sm:$0xff]
    %v2142 = vld [vmem:[%s11 + $0xf0] sm:$0xff]
    %v2143 = vld [vmem:[%s11 + $0xf8] sm:$0xff]
    %v2144 = vmul.f32 %v2112, 0.015625
    %v2145 = vmul.f32 %v2113, 0.015625
    %v2146 = vmul.f32 %v2114, 0.015625
    %v2147 = vmul.f32 %v2115, 0.015625
    %v2148 = vmul.f32 %v2116, 0.015625
    %v2149 = vmul.f32 %v2117, 0.015625
    %v2150 = vmul.f32 %v2118, 0.015625
    %v2151 = vmul.f32 %v2119, 0.015625
    %v2152 = vmul.f32 %v2120, 0.015625
    %v2153 = vmul.f32 %v2121, 0.015625
    %v2154 = vmul.f32 %v2122, 0.015625
    %v2155 = vmul.f32 %v2123, 0.015625
    %v2156 = vmul.f32 %v2124, 0.015625
    %v2157 = vmul.f32 %v2125, 0.015625
    %v2158 = vmul.f32 %v2126, 0.015625
    %v2159 = vmul.f32 %v2127, 0.015625
    %v2160 = vmul.f32 %v2128, 0.015625
    %v2161 = vmul.f32 %v2129, 0.015625
    %v2162 = vmul.f32 %v2130, 0.015625
    %v2163 = vmul.f32 %v2131, 0.015625
    %v2164 = vmul.f32 %v2132, 0.015625
    %v2165 = vmul.f32 %v2133, 0.015625
    %v2166 = vmul.f32 %v2134, 0.015625
    %v2167 = vmul.f32 %v2135, 0.015625
    %v2168 = vmul.f32 %v2136, 0.015625
    %v2169 = vmul.f32 %v2137, 0.015625
    %v2170 = vmul.f32 %v2138, 0.015625
    %v2171 = vmul.f32 %v2139, 0.015625
    %v2172 = vmul.f32 %v2140, 0.015625
    %v2173 = vmul.f32 %v2141, 0.015625
    %v2174 = vmul.f32 %v2142, 0.015625
    %v2175 = vmul.f32 %v2143, 0.015625
    %v2176 = vmul.f32 %v1569, %v2144
    %v2177 = vmul.f32 %v1574, %v2145
    %v2178 = vmul.f32 %v1579, %v2146
    %v2179 = vmul.f32 %v1584, %v2147
    %v2180 = vmul.f32 %v1589, %v2148
    %v2181 = vmul.f32 %v1594, %v2149
    %v2182 = vmul.f32 %v1599, %v2150
    %v2183 = vmul.f32 %v1604, %v2151
    %v2184 = vmul.f32 %v1609, %v2152
    %v2185 = vmul.f32 %v1614, %v2153
    %v2186 = vmul.f32 %v1619, %v2154
    %v2187 = vmul.f32 %v1624, %v2155
    %v2188 = vmul.f32 %v1629, %v2156
    %v2189 = vmul.f32 %v1634, %v2157
    %v2190 = vmul.f32 %v1639, %v2158
    %v2191 = vmul.f32 %v1644, %v2159
    %v2192 = vmul.f32 %v1649, %v2160
    %v2193 = vmul.f32 %v1654, %v2161
    %v2194 = vmul.f32 %v1659, %v2162
    %v2195 = vmul.f32 %v1664, %v2163
    %v2196 = vmul.f32 %v1669, %v2164
    %v2197 = vmul.f32 %v1674, %v2165
    %v2198 = vmul.f32 %v1679, %v2166
    %v2199 = vmul.f32 %v1684, %v2167
    %v2200 = vmul.f32 %v1689, %v2168
    %v2201 = vmul.f32 %v1694, %v2169
    %v2202 = vmul.f32 %v1699, %v2170
    %v2203 = vmul.f32 %v1704, %v2171
    %v2204 = vmul.f32 %v1709, %v2172
    %v2205 = vmul.f32 %v1714, %v2173
    %v2206 = vmul.f32 %v1719, %v2174
    %v2207 = vmul.f32 %v1724, %v2175
    %v2208 = vmul.f32 %v1954, %v2144
    %v2209 = vmul.f32 %v1959, %v2145
    %v2210 = vmul.f32 %v1964, %v2146
    %v2211 = vmul.f32 %v1969, %v2147
    %v2212 = vmul.f32 %v1974, %v2148
    %v2213 = vmul.f32 %v1979, %v2149
    %v2214 = vmul.f32 %v1984, %v2150
    %v2215 = vmul.f32 %v1989, %v2151
    %v2216 = vmul.f32 %v1994, %v2152
    %v2217 = vmul.f32 %v1999, %v2153
    %v2218 = vmul.f32 %v2004, %v2154
    %v2219 = vmul.f32 %v2009, %v2155
    %v2220 = vmul.f32 %v2014, %v2156
    %v2221 = vmul.f32 %v2019, %v2157
    %v2222 = vmul.f32 %v2024, %v2158
    %v2223 = vmul.f32 %v2029, %v2159
    %v2224 = vmul.f32 %v2034, %v2160
    %v2225 = vmul.f32 %v2039, %v2161
    %v2226 = vmul.f32 %v2044, %v2162
    %v2227 = vmul.f32 %v2049, %v2163
    %v2228 = vmul.f32 %v2054, %v2164
    %v2229 = vmul.f32 %v2059, %v2165
    %v2230 = vmul.f32 %v2064, %v2166
    %v2231 = vmul.f32 %v2069, %v2167
    %v2232 = vmul.f32 %v2074, %v2168
    %v2233 = vmul.f32 %v2079, %v2169
    %v2234 = vmul.f32 %v2084, %v2170
    %v2235 = vmul.f32 %v2089, %v2171
    %v2236 = vmul.f32 %v2094, %v2172
    %v2237 = vmul.f32 %v2099, %v2173
    %v2238 = vmul.f32 %v2104, %v2174
    %v2239 = vmul.f32 %v2109, %v2175
    %2240 = vmatprep.subr.mxu0 0.0
    %2241 = vmatpush1.msra.mxu0 %v2176
    %2242 = vmatprep.subr.mxu0 0.0
    %2243 = vmatpush1.msra.mxu0 %v2177
    %2244 = vmatprep.subr.mxu0 0.0
    %2245 = vmatpush1.msra.mxu0 %v2178
    %2246 = vmatprep.subr.mxu0 0.0
    %2247 = vmatpush1.msra.mxu0 %v2179
    %2248 = vmatprep.subr.mxu0 0.0
    %2249 = vmatpush1.msra.mxu0 %v2180
    %2250 = vmatprep.subr.mxu0 0.0
    %2251 = vmatpush1.msra.mxu0 %v2181
    %2252 = vmatprep.subr.mxu0 0.0
    %2253 = vmatpush1.msra.mxu0 %v2182
    %2254 = vmatprep.subr.mxu0 0.0
    %2255 = vmatpush1.msra.mxu0 %v2183
    %2256 = vmatprep.subr.mxu0 0.0
    %2257 = vmatpush1.msra.mxu0 %v2184
    %2258 = vmatprep.subr.mxu0 0.0
    %2259 = vmatpush1.msra.mxu0 %v2185
    %2260 = vmatprep.subr.mxu0 0.0
    %2261 = vmatpush1.msra.mxu0 %v2186
    %2262 = vmatprep.subr.mxu0 0.0
    %2263 = vmatpush1.msra.mxu0 %v2187
    %2264 = vmatprep.subr.mxu0 0.0
    %2265 = vmatpush1.msra.mxu0 %v2188
    %2266 = vmatprep.subr.mxu0 0.0
    %2267 = vmatpush1.msra.mxu0 %v2189
    %2268 = vmatprep.subr.mxu0 0.0
    %2269 = vmatpush1.msra.mxu0 %v2190
    %2270 = vmatprep.subr.mxu0 0.0
    %2271 = vmatpush1.msra.mxu0 %v2191
    %2272 = vmatprep.subr.mxu0 0.0
    %2273 = vmatpush1.msra.mxu0 %v2192
    %2274 = vmatprep.subr.mxu0 0.0
    %2275 = vmatpush1.msra.mxu0 %v2193
    %2276 = vmatprep.subr.mxu0 0.0
    %2277 = vmatpush1.msra.mxu0 %v2194
    %2278 = vmatprep.subr.mxu0 0.0
    %2279 = vmatpush1.msra.mxu0 %v2195
    %2280 = vmatprep.subr.mxu0 0.0
    %2281 = vmatpush1.msra.mxu0 %v2196
    %2282 = vmatprep.subr.mxu0 0.0
    %2283 = vmatpush1.msra.mxu0 %v2197
    %2284 = vmatprep.subr.mxu0 0.0
    %2285 = vmatpush1.msra.mxu0 %v2198
    %2286 = vmatprep.subr.mxu0 0.0
    %2287 = vmatpush1.msra.mxu0 %v2199
    %2288 = vmatprep.subr.mxu0 0.0
    %2289 = vmatpush1.msra.mxu0 %v2200
    %2290 = vmatprep.subr.mxu0 0.0
    %2291 = vmatpush1.msra.mxu0 %v2201
    %2292 = vmatprep.subr.mxu0 0.0
    %2293 = vmatpush1.msra.mxu0 %v2202
    %2294 = vmatprep.subr.mxu0 0.0
    %2295 = vmatpush1.msra.mxu0 %v2203
    %2296 = vmatprep.subr.mxu0 0.0
    %2297 = vmatpush1.msra.mxu0 %v2204
    %2298 = vmatprep.subr.mxu0 0.0
    %2299 = vmatpush1.msra.mxu0 %v2205
    %2300 = vmatprep.subr.mxu0 0.0
    %2301 = vmatpush1.msra.mxu0 %v2206
    %2302 = vmatprep.subr.mxu0 0.0
    %2303 = vmatpush1.msra.mxu0 %v2207
    %2304 = vmatprep.mubr.f32.mxu0 %v639
    %2305 = vmatmul.mubr.f32.gmra.mrb[0].mxu0 %v536
    %v2306 = vpop.f32.mrb[0].mxu0
    %v2307 = vadd.f32 0.0, %v2306
    %v2308 = vpop.f32.mrb[0].mxu0
    %2309 = vdwg.mxu0
    %2310 = vmatprep.subr.mxu0 0.0
    %2311 = vmatpush1.msra.mxu0 %v2208
    %2312 = vmatprep.subr.mxu0 0.0
    %2313 = vmatpush1.msra.mxu0 %v2209
    %2314 = vmatprep.subr.mxu0 0.0
    %2315 = vmatpush1.msra.mxu0 %v2210
    %2316 = vmatprep.subr.mxu0 0.0
    %2317 = vmatpush1.msra.mxu0 %v2211
    %2318 = vmatprep.subr.mxu0 0.0
    %2319 = vmatpush1.msra.mxu0 %v2212
    %2320 = vmatprep.subr.mxu0 0.0
    %2321 = vmatpush1.msra.mxu0 %v2213
    %2322 = vmatprep.subr.mxu0 0.0
    %2323 = vmatpush1.msra.mxu0 %v2214
    %2324 = vmatprep.subr.mxu0 0.0
    %2325 = vmatpush1.msra.mxu0 %v2215
    %2326 = vmatprep.subr.mxu0 0.0
    %2327 = vmatpush1.msra.mxu0 %v2216
    %2328 = vmatprep.subr.mxu0 0.0
    %2329 = vmatpush1.msra.mxu0 %v2217
    %2330 = vmatprep.subr.mxu0 0.0
    %2331 = vmatpush1.msra.mxu0 %v2218
    %2332 = vmatprep.subr.mxu0 0.0
    %2333 = vmatpush1.msra.mxu0 %v2219
    %2334 = vmatprep.subr.mxu0 0.0
    %2335 = vmatpush1.msra.mxu0 %v2220
    %2336 = vmatprep.subr.mxu0 0.0
    %2337 = vmatpush1.msra.mxu0 %v2221
    %2338 = vmatprep.subr.mxu0 0.0
    %2339 = vmatpush1.msra.mxu0 %v2222
    %2340 = vmatprep.subr.mxu0 0.0
    %2341 = vmatpush1.msra.mxu0 %v2223
    %2342 = vmatprep.subr.mxu0 0.0
    %2343 = vmatpush1.msra.mxu0 %v2224
    %2344 = vmatprep.subr.mxu0 0.0
    %2345 = vmatpush1.msra.mxu0 %v2225
    %2346 = vmatprep.subr.mxu0 0.0
    %2347 = vmatpush1.msra.mxu0 %v2226
    %2348 = vmatprep.subr.mxu0 0.0
    %2349 = vmatpush1.msra.mxu0 %v2227
    %2350 = vmatprep.subr.mxu0 0.0
    %2351 = vmatpush1.msra.mxu0 %v2228
    %2352 = vmatprep.subr.mxu0 0.0
    %2353 = vmatpush1.msra.mxu0 %v2229
    %2354 = vmatprep.subr.mxu0 0.0
    %2355 = vmatpush1.msra.mxu0 %v2230
    %2356 = vmatprep.subr.mxu0 0.0
    %2357 = vmatpush1.msra.mxu0 %v2231
    %2358 = vmatprep.subr.mxu0 0.0
    %2359 = vmatpush1.msra.mxu0 %v2232
    %2360 = vmatprep.subr.mxu0 0.0
    %2361 = vmatpush1.msra.mxu0 %v2233
    %2362 = vmatprep.subr.mxu0 0.0
    %2363 = vmatpush1.msra.mxu0 %v2234
    %2364 = vmatprep.subr.mxu0 0.0
    %2365 = vmatpush1.msra.mxu0 %v2235
    %2366 = vmatprep.subr.mxu0 0.0
    %2367 = vmatpush1.msra.mxu0 %v2236
    %2368 = vmatprep.subr.mxu0 0.0
    %2369 = vmatpush1.msra.mxu0 %v2237
    %2370 = vmatprep.subr.mxu0 0.0
    %2371 = vmatpush1.msra.mxu0 %v2238
    %2372 = vmatprep.subr.mxu0 0.0
    %2373 = vmatpush1.msra.mxu0 %v2239
    %2374 = vmatprep.mubr.f32.mxu0 %v845
    %2375 = vmatmul.mubr.f32.gmra.mrb[0].mxu0 %v742
    %v2376 = vpop.f32.mrb[0].mxu0
    %v2377 = vadd.f32 0.0, %v2376
    %v2378 = vpop.f32.mrb[0].mxu0
    %2379 = vdwg.mxu0
    %v2380 = vld [vmem:[%s12] sm:$0xff]
    %v2381 = vld [vmem:[%s12 + $0x8] sm:$0xff]
    %v2382 = vld [vmem:[%s12 + $0x10] sm:$0xff]
    %v2383 = vld [vmem:[%s12 + $0x18] sm:$0xff]
    %v2384 = vld [vmem:[%s13] sm:$0x1]
    %v2386 = vlaneseq
    %v2387 = vshrl.u32 %v2386, 7
    %v2388 = vsub.s32 0, %v2387
    %v2389 = vrot.slane %v2384, %v2388
    %v2392 = vsel %vm65, %v2307, 0
    %v2395 = vsel %vm65, %v2377, 0
    %2397 = vmatprep.subr.mxu0 0.0
    %2398 = vmatpush1.msra.mxu0 %v2380
    %2399 = vmatprep.subr.mxu0 0.0
    %2400 = vmatpush1.msra.mxu0 %v2381
    %2401 = vmatprep.subr.mxu0 0.0
    %2402 = vmatpush1.msra.mxu0 %v2382
    %2403 = vmatprep.subr.mxu0 0.0
    %2404 = vmatpush1.msra.mxu0 %v2383
    %2405 = vmatprep.subr.mxu0 0.0
    %2406 = vmatpush1.msra.mxu0 0.0
    %2407 = vmatprep.subr.mxu0 0.0
    %2408 = vmatpush1.msra.mxu0 0.0
    %2409 = vmatprep.subr.mxu0 0.0
    %2410 = vmatpush1.msra.mxu0 0.0
    %2411 = vmatprep.subr.mxu0 0.0
    %2412 = vmatpush1.msra.mxu0 0.0
    %2413 = vmatprep.subr.mxu0 0.0
    %2414 = vmatpush1.msra.mxu0 0.0
    %2415 = vmatprep.subr.mxu0 0.0
    %2416 = vmatpush1.msra.mxu0 0.0
    %2417 = vmatprep.subr.mxu0 0.0
    %2418 = vmatpush1.msra.mxu0 0.0
    %2419 = vmatprep.subr.mxu0 0.0
    %2420 = vmatpush1.msra.mxu0 0.0
    %2421 = vmatprep.subr.mxu0 0.0
    %2422 = vmatpush1.msra.mxu0 0.0
    %2423 = vmatprep.subr.mxu0 0.0
    %2424 = vmatpush1.msra.mxu0 0.0
    %2425 = vmatprep.subr.mxu0 0.0
    %2426 = vmatpush1.msra.mxu0 0.0
    %2427 = vmatprep.subr.mxu0 0.0
    %2428 = vmatpush1.msra.mxu0 0.0
    %2429 = vmatprep.subr.mxu0 0.0
    %2430 = vmatpush1.msra.mxu0 0.0
    %2431 = vmatprep.subr.mxu0 0.0
    %2432 = vmatpush1.msra.mxu0 0.0
    %2433 = vmatprep.subr.mxu0 0.0
    %2434 = vmatpush1.msra.mxu0 0.0
    %2435 = vmatprep.subr.mxu0 0.0
    %2436 = vmatpush1.msra.mxu0 0.0
    %2437 = vmatprep.subr.mxu0 0.0
    %2438 = vmatpush1.msra.mxu0 0.0
    %2439 = vmatprep.subr.mxu0 0.0
    %2440 = vmatpush1.msra.mxu0 0.0
    %2441 = vmatprep.subr.mxu0 0.0
    %2442 = vmatpush1.msra.mxu0 0.0
    %2443 = vmatprep.subr.mxu0 0.0
    %2444 = vmatpush1.msra.mxu0 0.0
    %2445 = vmatprep.subr.mxu0 0.0
    %2446 = vmatpush1.msra.mxu0 0.0
    %2447 = vmatprep.subr.mxu0 0.0
    %2448 = vmatpush1.msra.mxu0 0.0
    %2449 = vmatprep.subr.mxu0 0.0
    %2450 = vmatpush1.msra.mxu0 0.0
    %2451 = vmatprep.subr.mxu0 0.0
    %2452 = vmatpush1.msra.mxu0 0.0
    %2453 = vmatprep.subr.mxu0 0.0
    %2454 = vmatpush1.msra.mxu0 0.0
    %2455 = vmatprep.subr.mxu0 0.0
    %2456 = vmatpush1.msra.mxu0 0.0
    %2457 = vmatprep.subr.mxu0 0.0
    %2458 = vmatpush1.msra.mxu0 0.0
    %2459 = vmatprep.subr.mxu0 0.0
    %2460 = vmatpush1.msra.mxu0 0.0
    %2461 = vmatprep.mubr.f32.mxu0 0.0
    %2462 = vmatmul.mubr.f32.gmra.mrb[0].mxu0 %v2392
    %v2463 = vpop.f32.mrb[0].mxu0
    %v2464 = vadd.f32 %v2389, %v2463
    %v2465 = vpop.f32.mrb[0].mxu0
    %2466 = vmatprep.mubr.f32.mxu0 0.0
    %2467 = vmatmul.mubr.f32.gmra.mrb[0].mxu0 %v2395
    %v2468 = vpop.f32.mrb[0].mxu0
    %v2469 = vadd.f32 %v2389, %v2468
    %v2470 = vpop.f32.mrb[0].mxu0
    %2471 = vdwg.mxu0
    %2472 = vst.msk [vmem:[#allocation2] sm:$0xff] %vm65, %v2464
    %2473 = vst.msk [vmem:[#allocation2 + $0x8] sm:$0xff] %vm65, %v2469
    // Predicated region
    $region58: #{tpu_custom_call.1} parent=1 // pred_check
      _
    $region59: #{tpu_custom_call.1} parent=1 // pred_check_branch
      %2475 = sbr.rel (0) target = $region61
    $region60: #{tpu_custom_call.1} parent=1 // pred_region
      %s2477 = ssub.s32 256, 256
      %2478 = vsyncadd [#allocation3], %s2477
      %s2479 = sshll.u32 [#allocation2], 4
      %s2480 = int_to_ptr.vmem [resolvable:$true] %s2479
      %2485 = dma.vmem_to_hbm [thread:$0]  %s2480, 256, %s14, [#allocation3], 128, 128, 8
    $region61: #{tpu_custom_call.1} parent=1 // pred_fallthru
      _
    // Predicated region
    $region62: #{tpu_custom_call.1} parent=1 // pred_check
      _
    $region63: #{tpu_custom_call.1} parent=1 // pred_check_branch
      %2487 = sbr.rel (0) target = $region65
    $region64: #{tpu_custom_call.1} parent=1 // pred_region
      %2488 = dma.done [#allocation3], 256
    $region65: #{tpu_custom_call.1} parent=1 // pred_fallthru
      _
    %2489 = vsyncpa [#allocation3], 1

</llo_original>
